<compile_context>
chip_gen: v7x
topology: tpu7x:2x2x1
jax: 0.10.0
libtpu: 0.0.40
codegen_flags: <defaults>
</compile_context>

<pallas_src>
import functools

import jax
import jax.numpy as jnp
from jax.experimental import pallas as pl
from jax.experimental.pallas import tpu as pltpu


def rnn_kernel(tok_ref, emb_ref, wih_ref, whh_ref, b_ref, wout_ref, bout_ref,
               out_ref, x_scratch):
    """Single-invocation RNN forward.

    tok_ref   : (S*B,)       int32 token ids (SMEM, scalar prefetch), time-major
    emb_ref   : (V, Ep)      embedding table (lane-padded)
    wih_ref   : (Ep, Hp)     input->hidden weight (transposed, padded)
    whh_ref   : (Hp, Hp)     hidden->hidden weight (transposed, padded)
    b_ref     : (1, Hp)      combined bias b_ih + b_hh (padded)
    wout_ref  : (Hp, Op)     final linear weight (transposed, padded)
    bout_ref  : (1, Op)      final linear bias (padded)
    out_ref   : (B, Op)      relu(Linear(h_T)), lane-padded
    x_scratch : (S*B, Ep)    VMEM scratch for the gathered embeddings
    """
    B = out_ref.shape[0]
    SB = x_scratch.shape[0]
    S = SB // B

    # Phase 0: embedding gather, driven by SMEM token ids (no HBM round-trip
    # of the embedded activations).  Destination rows are static, only the
    # source sublane index is dynamic.
    for i in range(SB):
        x_scratch[pl.ds(i, 1), :] = emb_ref[pl.ds(tok_ref[i], 1), :]

    # Phase 1: time-independent projection for ALL steps in one MXU matmul,
    # with the combined bias folded in (off the serial critical path).
    xw = jnp.dot(x_scratch[...], wih_ref[...],
                 preferred_element_type=jnp.float32) + b_ref[...]

    # Phase 2: serial recurrence, fully unrolled (S is a trace-time constant;
    # switch to lax.fori_loop(unroll=k) if S grows beyond a few dozen).
    # h0 = 0 (PyTorch default), so step 0 needs no h @ W_hh matmul.
    # TODO(synk): if the recurrence ever dominates, keep W_hh resident in the
    # MXU weight registers via pltpu.matmul_push_rhs / matmul_acc_lhs /
    # matmul_pop instead of S-1 independent jnp.dot calls.
    whh = whh_ref[...]                      # hoist the weight load out of loop
    h = jnp.tanh(xw[0:B, :])
    for t in range(1, S):
        h = jnp.tanh(xw[t * B:(t + 1) * B, :]
                     + jnp.dot(h, whh, preferred_element_type=jnp.float32))

    # Phase 3: output head, single lane-dense (128-multiple) store.
    logits = jnp.dot(h, wout_ref[...],
                     preferred_element_type=jnp.float32) + bout_ref[...]
    out_ref[...] = jnp.maximum(logits, 0.0)  # F.relu


def prepare_params(emb_table, w_ih, w_hh, b_ih, b_hh, w_out, b_out, lane=128):
    """One-time parameter prep, hoisted out of the forward path.

    * weights are stored pre-transposed to (in, out) so the kernel does x @ W,
    * b = b_ih + b_hh (PyTorch nn.RNN adds both biases),
    * every feature axis (E, H, O) is zero-padded to a multiple of 128 lanes so
      all in-kernel loads/stores are lane-dense and unmasked.
    """
    E, H = w_ih.shape
    O = w_out.shape[1]
    V = emb_table.shape[0]

    def pad(n):
        return max(lane, ((n + lane - 1) // lane) * lane)

    Ep, Hp, Op = pad(E), pad(H), pad(O)

    emb_p = jnp.zeros((V, Ep), jnp.float32).at[:, :E].set(emb_table)
    wih_p = jnp.zeros((Ep, Hp), jnp.float32).at[:E, :H].set(w_ih)
    whh_p = jnp.zeros((Hp, Hp), jnp.float32).at[:H, :H].set(w_hh)
    b_p = jnp.zeros((1, Hp), jnp.float32).at[0, :H].set(b_ih + b_hh)
    wout_p = jnp.zeros((Hp, Op), jnp.float32).at[:H, :O].set(w_out)
    bout_p = jnp.zeros((1, Op), jnp.float32).at[0, :O].set(b_out)
    return emb_p, wih_p, whh_p, b_p, wout_p, bout_p


@functools.partial(jax.jit, static_argnames=("out_dim",))
def rnn_forward(tokens, emb_p, wih_p, whh_p, b_p, wout_p, bout_p, *, out_dim):
    """tokens: (S, B) int32 (seq-first, PyTorch nn.RNN default).

    Returns relu(Linear(h_T)) of shape (B, out_dim).
    """
    S, B = tokens.shape
    SB = S * B
    V, Ep = emb_p.shape
    Hp = whh_p.shape[0]
    Op = wout_p.shape[1]

    # Keep the per-step xw slice on f32 sublane boundaries (perf cliff if not).
    assert B % 8 == 0, "batch must be a multiple of 8 (f32 sublane)"

    tokens_flat = tokens.reshape(SB).astype(jnp.int32)

    # grid=(1,): everything resident in VMEM (a few hundred KiB), no pipelining
    # needed; default double-buffering is harmless at this footprint.
    grid_spec = pltpu.PrefetchScalarGridSpec(
        num_scalar_prefetch=1,                 # tokens -> SMEM
        grid=(1,),
        in_specs=[
            pl.BlockSpec((V, Ep), lambda i, tok: (0, 0)),    # embedding table
            pl.BlockSpec((Ep, Hp), lambda i, tok: (0, 0)),   # W_ih^T (padded)
            pl.BlockSpec((Hp, Hp), lambda i, tok: (0, 0)),   # W_hh^T (padded)
            pl.BlockSpec((1, Hp), lambda i, tok: (0, 0)),    # b_ih + b_hh
            pl.BlockSpec((Hp, Op), lambda i, tok: (0, 0)),   # W_out^T (padded)
            pl.BlockSpec((1, Op), lambda i, tok: (0, 0)),    # b_out (padded)
        ],
        out_specs=pl.BlockSpec((B, Op), lambda i, tok: (0, 0)),
        scratch_shapes=[pltpu.VMEM((SB, Ep), jnp.float32)],  # gathered embeds
    )

    out_padded = pl.pallas_call(
        rnn_kernel,
        out_shape=jax.ShapeDtypeStruct((B, Op), jnp.float32),
        grid_spec=grid_spec,
        compiler_params=pltpu.CompilerParams(
            dimension_semantics=("arbitrary",),
        ),
    )(tokens_flat, emb_p, wih_p, whh_p, b_p, wout_p, bout_p)

    return out_padded[:, :out_dim]


def rnn_reference(tokens, emb_table, w_ih, w_hh, b, w_out, b_out):
    """Pure-JAX reference mirroring PyTorch nn.RNN(tanh) + ReLU(Linear)."""
    embedded = emb_table[tokens]  # (S, B, E)

    def step(h, x_t):
        h_new = jnp.tanh(x_t @ w_ih + h @ w_hh + b)
        return h_new, None

    h0 = jnp.zeros((tokens.shape[1], w_hh.shape[0]), jnp.float32)
    h_T, _ = jax.lax.scan(step, h0, embedded)
    return jnp.maximum(h_T @ w_out + b_out, 0.0)


if __name__ == "__main__":
    # Small shapes consistent with the module's forward.
    VOCAB, EMB, HID, OUT = 50, 32, 32, 8
    SEQ, BATCH = 8, 8

    key = jax.random.PRNGKey(0)
    k_emb, k_ih, k_hh, k_b1, k_b2, k_wo, k_bo, k_tok = jax.random.split(key, 8)

    # Deterministic synthetic parameters (shapes match nn.Embedding/nn.RNN/nn.Linear).
    emb_table = jax.random.normal(k_emb, (VOCAB, EMB), jnp.float32) * 0.1
    w_ih = jax.random.normal(k_ih, (EMB, HID), jnp.float32) * 0.1   # = W_ih^T
    w_hh = jax.random.normal(k_hh, (HID, HID), jnp.float32) * 0.1   # = W_hh^T
    b_ih = jax.random.normal(k_b1, (HID,), jnp.float32) * 0.1
    b_hh = jax.random.normal(k_b2, (HID,), jnp.float32) * 0.1
    w_out = jax.random.normal(k_wo, (HID, OUT), jnp.float32) * 0.1  # = W_out^T
    b_out = jax.random.normal(k_bo, (OUT,), jnp.float32) * 0.1

    tokens = jax.random.randint(k_tok, (SEQ, BATCH), 0, VOCAB, jnp.int32)

    # One-time parameter prep (padding / bias fusion) — NOT on the forward path.
    params = prepare_params(emb_table, w_ih, w_hh, b_ih, b_hh, w_out, b_out)
    params = jax.block_until_ready(params)

    out = rnn_forward(tokens, *params, out_dim=OUT)
    out = jax.block_until_ready(out)

    ref = rnn_reference(tokens, emb_table, w_ih, w_hh, b_ih + b_hh, w_out, b_out)
    assert out.shape == (BATCH, OUT)
    assert jnp.allclose(out, ref, atol=1e-5, rtol=1e-5), "mismatch vs JAX reference"

    print("KERNEL_OK")
</pallas_src>

<mosaic_0001>
module attributes {stable_mosaic.version = 11 : i64} {
  func.func @rnn_kernel(%arg0: i32, %arg1: memref<64xi32, #tpu.memory_space<smem>>, %arg2: memref<50x128xf32, #tpu.memory_space<vmem>>, %arg3: memref<128x128xf32, #tpu.memory_space<vmem>>, %arg4: memref<128x128xf32, #tpu.memory_space<vmem>>, %arg5: memref<1x128xf32, #tpu.memory_space<vmem>>, %arg6: memref<128x128xf32, #tpu.memory_space<vmem>>, %arg7: memref<1x128xf32, #tpu.memory_space<vmem>>, %arg8: memref<8x128xf32, #tpu.memory_space<vmem>>, %arg9: memref<64x128xf32, #tpu.memory_space<vmem>>) attributes {dimension_semantics = [#tpu.dimension_semantics<arbitrary>], iteration_bounds = array<i64: 1>, scalar_prefetch = 1 : i64, scratch_operands = 1 : i64, tpu.core_type = #tpu.core_type<tc>, window_params = [{pipeline_mode = #tpu.pipeline_mode<synchronous>, transform_indices = @transform_0, window_bounds = array<i64: 50, 128>}, {pipeline_mode = #tpu.pipeline_mode<synchronous>, transform_indices = @transform_1, window_bounds = array<i64: 128, 128>}, {pipeline_mode = #tpu.pipeline_mode<synchronous>, transform_indices = @transform_2, window_bounds = array<i64: 128, 128>}, {pipeline_mode = #tpu.pipeline_mode<synchronous>, transform_indices = @transform_3, window_bounds = array<i64: 1, 128>}, {pipeline_mode = #tpu.pipeline_mode<synchronous>, transform_indices = @transform_4, window_bounds = array<i64: 128, 128>}, {pipeline_mode = #tpu.pipeline_mode<synchronous>, transform_indices = @transform_5, window_bounds = array<i64: 1, 128>}, {pipeline_mode = #tpu.pipeline_mode<synchronous>, transform_indices = @transform_6, window_bounds = array<i64: 8, 128>}]} {
    %c0 = arith.constant 0 : index
    %0 = memref.load %arg1[%c0] : memref<64xi32, #tpu.memory_space<smem>>
    %1 = arith.index_cast %0 : i32 to index
    %c0_0 = arith.constant 0 : index
    %2 = vector.load %arg2[%1, %c0_0] : memref<50x128xf32, #tpu.memory_space<vmem>>, vector<1x128xf32>
    %c0_1 = arith.constant 0 : index
    %c0_2 = arith.constant 0 : index
    %3 = vector.load %arg9[%c0_1, %c0_2] : memref<64x128xf32, #tpu.memory_space<vmem>>, vector<1x128xf32>
    tpu.vector_store %arg9[%c0_1, %c0_2], %2 {strides = array<i32>} : memref<64x128xf32, #tpu.memory_space<vmem>>, vector<1x128xf32>,
    %c1 = arith.constant 1 : index
    %4 = memref.load %arg1[%c1] : memref<64xi32, #tpu.memory_space<smem>>
    %5 = arith.index_cast %4 : i32 to index
    %c0_3 = arith.constant 0 : index
    %6 = vector.load %arg2[%5, %c0_3] : memref<50x128xf32, #tpu.memory_space<vmem>>, vector<1x128xf32>
    %c1_4 = arith.constant 1 : index
    %c0_5 = arith.constant 0 : index
    %7 = vector.load %arg9[%c1_4, %c0_5] : memref<64x128xf32, #tpu.memory_space<vmem>>, vector<1x128xf32>
    tpu.vector_store %arg9[%c1_4, %c0_5], %6 {strides = array<i32>} : memref<64x128xf32, #tpu.memory_space<vmem>>, vector<1x128xf32>,
    %c2 = arith.constant 2 : index
    %8 = memref.load %arg1[%c2] : memref<64xi32, #tpu.memory_space<smem>>
    %9 = arith.index_cast %8 : i32 to index
    %c0_6 = arith.constant 0 : index
    %10 = vector.load %arg2[%9, %c0_6] : memref<50x128xf32, #tpu.memory_space<vmem>>, vector<1x128xf32>
    %c2_7 = arith.constant 2 : index
    %c0_8 = arith.constant 0 : index
    %11 = vector.load %arg9[%c2_7, %c0_8] : memref<64x128xf32, #tpu.memory_space<vmem>>, vector<1x128xf32>
    tpu.vector_store %arg9[%c2_7, %c0_8], %10 {strides = array<i32>} : memref<64x128xf32, #tpu.memory_space<vmem>>, vector<1x128xf32>,
    %c3 = arith.constant 3 : index
    %12 = memref.load %arg1[%c3] : memref<64xi32, #tpu.memory_space<smem>>
    %13 = arith.index_cast %12 : i32 to index
    %c0_9 = arith.constant 0 : index
    %14 = vector.load %arg2[%13, %c0_9] : memref<50x128xf32, #tpu.memory_space<vmem>>, vector<1x128xf32>
    %c3_10 = arith.constant 3 : index
    %c0_11 = arith.constant 0 : index
    %15 = vector.load %arg9[%c3_10, %c0_11] : memref<64x128xf32, #tpu.memory_space<vmem>>, vector<1x128xf32>
    tpu.vector_store %arg9[%c3_10, %c0_11], %14 {strides = array<i32>} : memref<64x128xf32, #tpu.memory_space<vmem>>, vector<1x128xf32>,
    %c4 = arith.constant 4 : index
    %16 = memref.load %arg1[%c4] : memref<64xi32, #tpu.memory_space<smem>>
    %17 = arith.index_cast %16 : i32 to index
    %c0_12 = arith.constant 0 : index
    %18 = vector.load %arg2[%17, %c0_12] : memref<50x128xf32, #tpu.memory_space<vmem>>, vector<1x128xf32>
    %c4_13 = arith.constant 4 : index
    %c0_14 = arith.constant 0 : index
    %19 = vector.load %arg9[%c4_13, %c0_14] : memref<64x128xf32, #tpu.memory_space<vmem>>, vector<1x128xf32>
    tpu.vector_store %arg9[%c4_13, %c0_14], %18 {strides = array<i32>} : memref<64x128xf32, #tpu.memory_space<vmem>>, vector<1x128xf32>,
    %c5 = arith.constant 5 : index
    %20 = memref.load %arg1[%c5] : memref<64xi32, #tpu.memory_space<smem>>
    %21 = arith.index_cast %20 : i32 to index
    %c0_15 = arith.constant 0 : index
    %22 = vector.load %arg2[%21, %c0_15] : memref<50x128xf32, #tpu.memory_space<vmem>>, vector<1x128xf32>
    %c5_16 = arith.constant 5 : index
    %c0_17 = arith.constant 0 : index
    %23 = vector.load %arg9[%c5_16, %c0_17] : memref<64x128xf32, #tpu.memory_space<vmem>>, vector<1x128xf32>
    tpu.vector_store %arg9[%c5_16, %c0_17], %22 {strides = array<i32>} : memref<64x128xf32, #tpu.memory_space<vmem>>, vector<1x128xf32>,
    %c6 = arith.constant 6 : index
    %24 = memref.load %arg1[%c6] : memref<64xi32, #tpu.memory_space<smem>>
    %25 = arith.index_cast %24 : i32 to index
    %c0_18 = arith.constant 0 : index
    %26 = vector.load %arg2[%25, %c0_18] : memref<50x128xf32, #tpu.memory_space<vmem>>, vector<1x128xf32>
    %c6_19 = arith.constant 6 : index
    %c0_20 = arith.constant 0 : index
    %27 = vector.load %arg9[%c6_19, %c0_20] : memref<64x128xf32, #tpu.memory_space<vmem>>, vector<1x128xf32>
    tpu.vector_store %arg9[%c6_19, %c0_20], %26 {strides = array<i32>} : memref<64x128xf32, #tpu.memory_space<vmem>>, vector<1x128xf32>,
    %c7 = arith.constant 7 : index
    %28 = memref.load %arg1[%c7] : memref<64xi32, #tpu.memory_space<smem>>
    %29 = arith.index_cast %28 : i32 to index
    %c0_21 = arith.constant 0 : index
    %30 = vector.load %arg2[%29, %c0_21] : memref<50x128xf32, #tpu.memory_space<vmem>>, vector<1x128xf32>
    %c7_22 = arith.constant 7 : index
    %c0_23 = arith.constant 0 : index
    %31 = vector.load %arg9[%c7_22, %c0_23] : memref<64x128xf32, #tpu.memory_space<vmem>>, vector<1x128xf32>
    tpu.vector_store %arg9[%c7_22, %c0_23], %30 {strides = array<i32>} : memref<64x128xf32, #tpu.memory_space<vmem>>, vector<1x128xf32>,
    %c8 = arith.constant 8 : index
    %32 = memref.load %arg1[%c8] : memref<64xi32, #tpu.memory_space<smem>>
    %33 = arith.index_cast %32 : i32 to index
    %c0_24 = arith.constant 0 : index
    %34 = vector.load %arg2[%33, %c0_24] : memref<50x128xf32, #tpu.memory_space<vmem>>, vector<1x128xf32>
    %c8_25 = arith.constant 8 : index
    %c0_26 = arith.constant 0 : index
    %35 = vector.load %arg9[%c8_25, %c0_26] : memref<64x128xf32, #tpu.memory_space<vmem>>, vector<1x128xf32>
    tpu.vector_store %arg9[%c8_25, %c0_26], %34 {strides = array<i32>} : memref<64x128xf32, #tpu.memory_space<vmem>>, vector<1x128xf32>,
    %c9 = arith.constant 9 : index
    %36 = memref.load %arg1[%c9] : memref<64xi32, #tpu.memory_space<smem>>
    %37 = arith.index_cast %36 : i32 to index
    %c0_27 = arith.constant 0 : index
    %38 = vector.load %arg2[%37, %c0_27] : memref<50x128xf32, #tpu.memory_space<vmem>>, vector<1x128xf32>
    %c9_28 = arith.constant 9 : index
    %c0_29 = arith.constant 0 : index
    %39 = vector.load %arg9[%c9_28, %c0_29] : memref<64x128xf32, #tpu.memory_space<vmem>>, vector<1x128xf32>
    tpu.vector_store %arg9[%c9_28, %c0_29], %38 {strides = array<i32>} : memref<64x128xf32, #tpu.memory_space<vmem>>, vector<1x128xf32>,
    %c10 = arith.constant 10 : index
    %40 = memref.load %arg1[%c10] : memref<64xi32, #tpu.memory_space<smem>>
    %41 = arith.index_cast %40 : i32 to index
    %c0_30 = arith.constant 0 : index
    %42 = vector.load %arg2[%41, %c0_30] : memref<50x128xf32, #tpu.memory_space<vmem>>, vector<1x128xf32>
    %c10_31 = arith.constant 10 : index
    %c0_32 = arith.constant 0 : index
    %43 = vector.load %arg9[%c10_31, %c0_32] : memref<64x128xf32, #tpu.memory_space<vmem>>, vector<1x128xf32>
    tpu.vector_store %arg9[%c10_31, %c0_32], %42 {strides = array<i32>} : memref<64x128xf32, #tpu.memory_space<vmem>>, vector<1x128xf32>,
    %c11 = arith.constant 11 : index
    %44 = memref.load %arg1[%c11] : memref<64xi32, #tpu.memory_space<smem>>
    %45 = arith.index_cast %44 : i32 to index
    %c0_33 = arith.constant 0 : index
    %46 = vector.load %arg2[%45, %c0_33] : memref<50x128xf32, #tpu.memory_space<vmem>>, vector<1x128xf32>
    %c11_34 = arith.constant 11 : index
    %c0_35 = arith.constant 0 : index
    %47 = vector.load %arg9[%c11_34, %c0_35] : memref<64x128xf32, #tpu.memory_space<vmem>>, vector<1x128xf32>
    tpu.vector_store %arg9[%c11_34, %c0_35], %46 {strides = array<i32>} : memref<64x128xf32, #tpu.memory_space<vmem>>, vector<1x128xf32>,
    %c12 = arith.constant 12 : index
    %48 = memref.load %arg1[%c12] : memref<64xi32, #tpu.memory_space<smem>>
    %49 = arith.index_cast %48 : i32 to index
    %c0_36 = arith.constant 0 : index
    %50 = vector.load %arg2[%49, %c0_36] : memref<50x128xf32, #tpu.memory_space<vmem>>, vector<1x128xf32>
    %c12_37 = arith.constant 12 : index
    %c0_38 = arith.constant 0 : index
    %51 = vector.load %arg9[%c12_37, %c0_38] : memref<64x128xf32, #tpu.memory_space<vmem>>, vector<1x128xf32>
    tpu.vector_store %arg9[%c12_37, %c0_38], %50 {strides = array<i32>} : memref<64x128xf32, #tpu.memory_space<vmem>>, vector<1x128xf32>,
    %c13 = arith.constant 13 : index
    %52 = memref.load %arg1[%c13] : memref<64xi32, #tpu.memory_space<smem>>
    %53 = arith.index_cast %52 : i32 to index
    %c0_39 = arith.constant 0 : index
    %54 = vector.load %arg2[%53, %c0_39] : memref<50x128xf32, #tpu.memory_space<vmem>>, vector<1x128xf32>
    %c13_40 = arith.constant 13 : index
    %c0_41 = arith.constant 0 : index
    %55 = vector.load %arg9[%c13_40, %c0_41] : memref<64x128xf32, #tpu.memory_space<vmem>>, vector<1x128xf32>
    tpu.vector_store %arg9[%c13_40, %c0_41], %54 {strides = array<i32>} : memref<64x128xf32, #tpu.memory_space<vmem>>, vector<1x128xf32>,
    %c14 = arith.constant 14 : index
    %56 = memref.load %arg1[%c14] : memref<64xi32, #tpu.memory_space<smem>>
    %57 = arith.index_cast %56 : i32 to index
    %c0_42 = arith.constant 0 : index
    %58 = vector.load %arg2[%57, %c0_42] : memref<50x128xf32, #tpu.memory_space<vmem>>, vector<1x128xf32>
    %c14_43 = arith.constant 14 : index
    %c0_44 = arith.constant 0 : index
    %59 = vector.load %arg9[%c14_43, %c0_44] : memref<64x128xf32, #tpu.memory_space<vmem>>, vector<1x128xf32>
    tpu.vector_store %arg9[%c14_43, %c0_44], %58 {strides = array<i32>} : memref<64x128xf32, #tpu.memory_space<vmem>>, vector<1x128xf32>,
    %c15 = arith.constant 15 : index
    %60 = memref.load %arg1[%c15] : memref<64xi32, #tpu.memory_space<smem>>
    %61 = arith.index_cast %60 : i32 to index
    %c0_45 = arith.constant 0 : index
    %62 = vector.load %arg2[%61, %c0_45] : memref<50x128xf32, #tpu.memory_space<vmem>>, vector<1x128xf32>
    %c15_46 = arith.constant 15 : index
    %c0_47 = arith.constant 0 : index
    %63 = vector.load %arg9[%c15_46, %c0_47] : memref<64x128xf32, #tpu.memory_space<vmem>>, vector<1x128xf32>
    tpu.vector_store %arg9[%c15_46, %c0_47], %62 {strides = array<i32>} : memref<64x128xf32, #tpu.memory_space<vmem>>, vector<1x128xf32>,
    %c16 = arith.constant 16 : index
    %64 = memref.load %arg1[%c16] : memref<64xi32, #tpu.memory_space<smem>>
    %65 = arith.index_cast %64 : i32 to index
    %c0_48 = arith.constant 0 : index
    %66 = vector.load %arg2[%65, %c0_48] : memref<50x128xf32, #tpu.memory_space<vmem>>, vector<1x128xf32>
    %c16_49 = arith.constant 16 : index
    %c0_50 = arith.constant 0 : index
    %67 = vector.load %arg9[%c16_49, %c0_50] : memref<64x128xf32, #tpu.memory_space<vmem>>, vector<1x128xf32>
    tpu.vector_store %arg9[%c16_49, %c0_50], %66 {strides = array<i32>} : memref<64x128xf32, #tpu.memory_space<vmem>>, vector<1x128xf32>,
    %c17 = arith.constant 17 : index
    %68 = memref.load %arg1[%c17] : memref<64xi32, #tpu.memory_space<smem>>
    %69 = arith.index_cast %68 : i32 to index
    %c0_51 = arith.constant 0 : index
    %70 = vector.load %arg2[%69, %c0_51] : memref<50x128xf32, #tpu.memory_space<vmem>>, vector<1x128xf32>
    %c17_52 = arith.constant 17 : index
    %c0_53 = arith.constant 0 : index
    %71 = vector.load %arg9[%c17_52, %c0_53] : memref<64x128xf32, #tpu.memory_space<vmem>>, vector<1x128xf32>
    tpu.vector_store %arg9[%c17_52, %c0_53], %70 {strides = array<i32>} : memref<64x128xf32, #tpu.memory_space<vmem>>, vector<1x128xf32>,
    %c18 = arith.constant 18 : index
    %72 = memref.load %arg1[%c18] : memref<64xi32, #tpu.memory_space<smem>>
    %73 = arith.index_cast %72 : i32 to index
    %c0_54 = arith.constant 0 : index
    %74 = vector.load %arg2[%73, %c0_54] : memref<50x128xf32, #tpu.memory_space<vmem>>, vector<1x128xf32>
    %c18_55 = arith.constant 18 : index
    %c0_56 = arith.constant 0 : index
    %75 = vector.load %arg9[%c18_55, %c0_56] : memref<64x128xf32, #tpu.memory_space<vmem>>, vector<1x128xf32>
    tpu.vector_store %arg9[%c18_55, %c0_56], %74 {strides = array<i32>} : memref<64x128xf32, #tpu.memory_space<vmem>>, vector<1x128xf32>,
    %c19 = arith.constant 19 : index
    %76 = memref.load %arg1[%c19] : memref<64xi32, #tpu.memory_space<smem>>
    %77 = arith.index_cast %76 : i32 to index
    %c0_57 = arith.constant 0 : index
    %78 = vector.load %arg2[%77, %c0_57] : memref<50x128xf32, #tpu.memory_space<vmem>>, vector<1x128xf32>
    %c19_58 = arith.constant 19 : index
    %c0_59 = arith.constant 0 : index
    %79 = vector.load %arg9[%c19_58, %c0_59] : memref<64x128xf32, #tpu.memory_space<vmem>>, vector<1x128xf32>
    tpu.vector_store %arg9[%c19_58, %c0_59], %78 {strides = array<i32>} : memref<64x128xf32, #tpu.memory_space<vmem>>, vector<1x128xf32>,
    %c20 = arith.constant 20 : index
    %80 = memref.load %arg1[%c20] : memref<64xi32, #tpu.memory_space<smem>>
    %81 = arith.index_cast %80 : i32 to index
    %c0_60 = arith.constant 0 : index
    %82 = vector.load %arg2[%81, %c0_60] : memref<50x128xf32, #tpu.memory_space<vmem>>, vector<1x128xf32>
    %c20_61 = arith.constant 20 : index
    %c0_62 = arith.constant 0 : index
    %83 = vector.load %arg9[%c20_61, %c0_62] : memref<64x128xf32, #tpu.memory_space<vmem>>, vector<1x128xf32>
    tpu.vector_store %arg9[%c20_61, %c0_62], %82 {strides = array<i32>} : memref<64x128xf32, #tpu.memory_space<vmem>>, vector<1x128xf32>,
    %c21 = arith.constant 21 : index
    %84 = memref.load %arg1[%c21] : memref<64xi32, #tpu.memory_space<smem>>
    %85 = arith.index_cast %84 : i32 to index
    %c0_63 = arith.constant 0 : index
    %86 = vector.load %arg2[%85, %c0_63] : memref<50x128xf32, #tpu.memory_space<vmem>>, vector<1x128xf32>
    %c21_64 = arith.constant 21 : index
    %c0_65 = arith.constant 0 : index
    %87 = vector.load %arg9[%c21_64, %c0_65] : memref<64x128xf32, #tpu.memory_space<vmem>>, vector<1x128xf32>
    tpu.vector_store %arg9[%c21_64, %c0_65], %86 {strides = array<i32>} : memref<64x128xf32, #tpu.memory_space<vmem>>, vector<1x128xf32>,
    %c22 = arith.constant 22 : index
    %88 = memref.load %arg1[%c22] : memref<64xi32, #tpu.memory_space<smem>>
    %89 = arith.index_cast %88 : i32 to index
    %c0_66 = arith.constant 0 : index
    %90 = vector.load %arg2[%89, %c0_66] : memref<50x128xf32, #tpu.memory_space<vmem>>, vector<1x128xf32>
    %c22_67 = arith.constant 22 : index
    %c0_68 = arith.constant 0 : index
    %91 = vector.load %arg9[%c22_67, %c0_68] : memref<64x128xf32, #tpu.memory_space<vmem>>, vector<1x128xf32>
    tpu.vector_store %arg9[%c22_67, %c0_68], %90 {strides = array<i32>} : memref<64x128xf32, #tpu.memory_space<vmem>>, vector<1x128xf32>,
    %c23 = arith.constant 23 : index
    %92 = memref.load %arg1[%c23] : memref<64xi32, #tpu.memory_space<smem>>
    %93 = arith.index_cast %92 : i32 to index
    %c0_69 = arith.constant 0 : index
    %94 = vector.load %arg2[%93, %c0_69] : memref<50x128xf32, #tpu.memory_space<vmem>>, vector<1x128xf32>
    %c23_70 = arith.constant 23 : index
    %c0_71 = arith.constant 0 : index
    %95 = vector.load %arg9[%c23_70, %c0_71] : memref<64x128xf32, #tpu.memory_space<vmem>>, vector<1x128xf32>
    tpu.vector_store %arg9[%c23_70, %c0_71], %94 {strides = array<i32>} : memref<64x128xf32, #tpu.memory_space<vmem>>, vector<1x128xf32>,
    %c24 = arith.constant 24 : index
    %96 = memref.load %arg1[%c24] : memref<64xi32, #tpu.memory_space<smem>>
    %97 = arith.index_cast %96 : i32 to index
    %c0_72 = arith.constant 0 : index
    %98 = vector.load %arg2[%97, %c0_72] : memref<50x128xf32, #tpu.memory_space<vmem>>, vector<1x128xf32>
    %c24_73 = arith.constant 24 : index
    %c0_74 = arith.constant 0 : index
    %99 = vector.load %arg9[%c24_73, %c0_74] : memref<64x128xf32, #tpu.memory_space<vmem>>, vector<1x128xf32>
    tpu.vector_store %arg9[%c24_73, %c0_74], %98 {strides = array<i32>} : memref<64x128xf32, #tpu.memory_space<vmem>>, vector<1x128xf32>,
    %c25 = arith.constant 25 : index
    %100 = memref.load %arg1[%c25] : memref<64xi32, #tpu.memory_space<smem>>
    %101 = arith.index_cast %100 : i32 to index
    %c0_75 = arith.constant 0 : index
    %102 = vector.load %arg2[%101, %c0_75] : memref<50x128xf32, #tpu.memory_space<vmem>>, vector<1x128xf32>
    %c25_76 = arith.constant 25 : index
    %c0_77 = arith.constant 0 : index
    %103 = vector.load %arg9[%c25_76, %c0_77] : memref<64x128xf32, #tpu.memory_space<vmem>>, vector<1x128xf32>
    tpu.vector_store %arg9[%c25_76, %c0_77], %102 {strides = array<i32>} : memref<64x128xf32, #tpu.memory_space<vmem>>, vector<1x128xf32>,
    %c26 = arith.constant 26 : index
    %104 = memref.load %arg1[%c26] : memref<64xi32, #tpu.memory_space<smem>>
    %105 = arith.index_cast %104 : i32 to index
    %c0_78 = arith.constant 0 : index
    %106 = vector.load %arg2[%105, %c0_78] : memref<50x128xf32, #tpu.memory_space<vmem>>, vector<1x128xf32>
    %c26_79 = arith.constant 26 : index
    %c0_80 = arith.constant 0 : index
    %107 = vector.load %arg9[%c26_79, %c0_80] : memref<64x128xf32, #tpu.memory_space<vmem>>, vector<1x128xf32>
    tpu.vector_store %arg9[%c26_79, %c0_80], %106 {strides = array<i32>} : memref<64x128xf32, #tpu.memory_space<vmem>>, vector<1x128xf32>,
    %c27 = arith.constant 27 : index
    %108 = memref.load %arg1[%c27] : memref<64xi32, #tpu.memory_space<smem>>
    %109 = arith.index_cast %108 : i32 to index
    %c0_81 = arith.constant 0 : index
    %110 = vector.load %arg2[%109, %c0_81] : memref<50x128xf32, #tpu.memory_space<vmem>>, vector<1x128xf32>
    %c27_82 = arith.constant 27 : index
    %c0_83 = arith.constant 0 : index
    %111 = vector.load %arg9[%c27_82, %c0_83] : memref<64x128xf32, #tpu.memory_space<vmem>>, vector<1x128xf32>
    tpu.vector_store %arg9[%c27_82, %c0_83], %110 {strides = array<i32>} : memref<64x128xf32, #tpu.memory_space<vmem>>, vector<1x128xf32>,
    %c28 = arith.constant 28 : index
    %112 = memref.load %arg1[%c28] : memref<64xi32, #tpu.memory_space<smem>>
    %113 = arith.index_cast %112 : i32 to index
    %c0_84 = arith.constant 0 : index
    %114 = vector.load %arg2[%113, %c0_84] : memref<50x128xf32, #tpu.memory_space<vmem>>, vector<1x128xf32>
    %c28_85 = arith.constant 28 : index
    %c0_86 = arith.constant 0 : index
    %115 = vector.load %arg9[%c28_85, %c0_86] : memref<64x128xf32, #tpu.memory_space<vmem>>, vector<1x128xf32>
    tpu.vector_store %arg9[%c28_85, %c0_86], %114 {strides = array<i32>} : memref<64x128xf32, #tpu.memory_space<vmem>>, vector<1x128xf32>,
    %c29 = arith.constant 29 : index
    %116 = memref.load %arg1[%c29] : memref<64xi32, #tpu.memory_space<smem>>
    %117 = arith.index_cast %116 : i32 to index
    %c0_87 = arith.constant 0 : index
    %118 = vector.load %arg2[%117, %c0_87] : memref<50x128xf32, #tpu.memory_space<vmem>>, vector<1x128xf32>
    %c29_88 = arith.constant 29 : index
    %c0_89 = arith.constant 0 : index
    %119 = vector.load %arg9[%c29_88, %c0_89] : memref<64x128xf32, #tpu.memory_space<vmem>>, vector<1x128xf32>
    tpu.vector_store %arg9[%c29_88, %c0_89], %118 {strides = array<i32>} : memref<64x128xf32, #tpu.memory_space<vmem>>, vector<1x128xf32>,
    %c30 = arith.constant 30 : index
    %120 = memref.load %arg1[%c30] : memref<64xi32, #tpu.memory_space<smem>>
    %121 = arith.index_cast %120 : i32 to index
    %c0_90 = arith.constant 0 : index
    %122 = vector.load %arg2[%121, %c0_90] : memref<50x128xf32, #tpu.memory_space<vmem>>, vector<1x128xf32>
    %c30_91 = arith.constant 30 : index
    %c0_92 = arith.constant 0 : index
    %123 = vector.load %arg9[%c30_91, %c0_92] : memref<64x128xf32, #tpu.memory_space<vmem>>, vector<1x128xf32>
    tpu.vector_store %arg9[%c30_91, %c0_92], %122 {strides = array<i32>} : memref<64x128xf32, #tpu.memory_space<vmem>>, vector<1x128xf32>,
    %c31 = arith.constant 31 : index
    %124 = memref.load %arg1[%c31] : memref<64xi32, #tpu.memory_space<smem>>
    %125 = arith.index_cast %124 : i32 to index
    %c0_93 = arith.constant 0 : index
    %126 = vector.load %arg2[%125, %c0_93] : memref<50x128xf32, #tpu.memory_space<vmem>>, vector<1x128xf32>
    %c31_94 = arith.constant 31 : index
    %c0_95 = arith.constant 0 : index
    %127 = vector.load %arg9[%c31_94, %c0_95] : memref<64x128xf32, #tpu.memory_space<vmem>>, vector<1x128xf32>
    tpu.vector_store %arg9[%c31_94, %c0_95], %126 {strides = array<i32>} : memref<64x128xf32, #tpu.memory_space<vmem>>, vector<1x128xf32>,
    %c32 = arith.constant 32 : index
    %128 = memref.load %arg1[%c32] : memref<64xi32, #tpu.memory_space<smem>>
    %129 = arith.index_cast %128 : i32 to index
    %c0_96 = arith.constant 0 : index
    %130 = vector.load %arg2[%129, %c0_96] : memref<50x128xf32, #tpu.memory_space<vmem>>, vector<1x128xf32>
    %c32_97 = arith.constant 32 : index
    %c0_98 = arith.constant 0 : index
    %131 = vector.load %arg9[%c32_97, %c0_98] : memref<64x128xf32, #tpu.memory_space<vmem>>, vector<1x128xf32>
    tpu.vector_store %arg9[%c32_97, %c0_98], %130 {strides = array<i32>} : memref<64x128xf32, #tpu.memory_space<vmem>>, vector<1x128xf32>,
    %c33 = arith.constant 33 : index
    %132 = memref.load %arg1[%c33] : memref<64xi32, #tpu.memory_space<smem>>
    %133 = arith.index_cast %132 : i32 to index
    %c0_99 = arith.constant 0 : index
    %134 = vector.load %arg2[%133, %c0_99] : memref<50x128xf32, #tpu.memory_space<vmem>>, vector<1x128xf32>
    %c33_100 = arith.constant 33 : index
    %c0_101 = arith.constant 0 : index
    %135 = vector.load %arg9[%c33_100, %c0_101] : memref<64x128xf32, #tpu.memory_space<vmem>>, vector<1x128xf32>
    tpu.vector_store %arg9[%c33_100, %c0_101], %134 {strides = array<i32>} : memref<64x128xf32, #tpu.memory_space<vmem>>, vector<1x128xf32>,
    %c34 = arith.constant 34 : index
    %136 = memref.load %arg1[%c34] : memref<64xi32, #tpu.memory_space<smem>>
    %137 = arith.index_cast %136 : i32 to index
    %c0_102 = arith.constant 0 : index
    %138 = vector.load %arg2[%137, %c0_102] : memref<50x128xf32, #tpu.memory_space<vmem>>, vector<1x128xf32>
    %c34_103 = arith.constant 34 : index
    %c0_104 = arith.constant 0 : index
    %139 = vector.load %arg9[%c34_103, %c0_104] : memref<64x128xf32, #tpu.memory_space<vmem>>, vector<1x128xf32>
    tpu.vector_store %arg9[%c34_103, %c0_104], %138 {strides = array<i32>} : memref<64x128xf32, #tpu.memory_space<vmem>>, vector<1x128xf32>,
    %c35 = arith.constant 35 : index
    %140 = memref.load %arg1[%c35] : memref<64xi32, #tpu.memory_space<smem>>
    %141 = arith.index_cast %140 : i32 to index
    %c0_105 = arith.constant 0 : index
    %142 = vector.load %arg2[%141, %c0_105] : memref<50x128xf32, #tpu.memory_space<vmem>>, vector<1x128xf32>
    %c35_106 = arith.constant 35 : index
    %c0_107 = arith.constant 0 : index
    %143 = vector.load %arg9[%c35_106, %c0_107] : memref<64x128xf32, #tpu.memory_space<vmem>>, vector<1x128xf32>
    tpu.vector_store %arg9[%c35_106, %c0_107], %142 {strides = array<i32>} : memref<64x128xf32, #tpu.memory_space<vmem>>, vector<1x128xf32>,
    %c36 = arith.constant 36 : index
    %144 = memref.load %arg1[%c36] : memref<64xi32, #tpu.memory_space<smem>>
    %145 = arith.index_cast %144 : i32 to index
    %c0_108 = arith.constant 0 : index
    %146 = vector.load %arg2[%145, %c0_108] : memref<50x128xf32, #tpu.memory_space<vmem>>, vector<1x128xf32>
    %c36_109 = arith.constant 36 : index
    %c0_110 = arith.constant 0 : index
    %147 = vector.load %arg9[%c36_109, %c0_110] : memref<64x128xf32, #tpu.memory_space<vmem>>, vector<1x128xf32>
    tpu.vector_store %arg9[%c36_109, %c0_110], %146 {strides = array<i32>} : memref<64x128xf32, #tpu.memory_space<vmem>>, vector<1x128xf32>,
    %c37 = arith.constant 37 : index
    %148 = memref.load %arg1[%c37] : memref<64xi32, #tpu.memory_space<smem>>
    %149 = arith.index_cast %148 : i32 to index
    %c0_111 = arith.constant 0 : index
    %150 = vector.load %arg2[%149, %c0_111] : memref<50x128xf32, #tpu.memory_space<vmem>>, vector<1x128xf32>
    %c37_112 = arith.constant 37 : index
    %c0_113 = arith.constant 0 : index
    %151 = vector.load %arg9[%c37_112, %c0_113] : memref<64x128xf32, #tpu.memory_space<vmem>>, vector<1x128xf32>
    tpu.vector_store %arg9[%c37_112, %c0_113], %150 {strides = array<i32>} : memref<64x128xf32, #tpu.memory_space<vmem>>, vector<1x128xf32>,
    %c38 = arith.constant 38 : index
    %152 = memref.load %arg1[%c38] : memref<64xi32, #tpu.memory_space<smem>>
    %153 = arith.index_cast %152 : i32 to index
    %c0_114 = arith.constant 0 : index
    %154 = vector.load %arg2[%153, %c0_114] : memref<50x128xf32, #tpu.memory_space<vmem>>, vector<1x128xf32>
    %c38_115 = arith.constant 38 : index
    %c0_116 = arith.constant 0 : index
    %155 = vector.load %arg9[%c38_115, %c0_116] : memref<64x128xf32, #tpu.memory_space<vmem>>, vector<1x128xf32>
    tpu.vector_store %arg9[%c38_115, %c0_116], %154 {strides = array<i32>} : memref<64x128xf32, #tpu.memory_space<vmem>>, vector<1x128xf32>,
    %c39 = arith.constant 39 : index
    %156 = memref.load %arg1[%c39] : memref<64xi32, #tpu.memory_space<smem>>
    %157 = arith.index_cast %156 : i32 to index
    %c0_117 = arith.constant 0 : index
    %158 = vector.load %arg2[%157, %c0_117] : memref<50x128xf32, #tpu.memory_space<vmem>>, vector<1x128xf32>
    %c39_118 = arith.constant 39 : index
    %c0_119 = arith.constant 0 : index
    %159 = vector.load %arg9[%c39_118, %c0_119] : memref<64x128xf32, #tpu.memory_space<vmem>>, vector<1x128xf32>
    tpu.vector_store %arg9[%c39_118, %c0_119], %158 {strides = array<i32>} : memref<64x128xf32, #tpu.memory_space<vmem>>, vector<1x128xf32>,
    %c40 = arith.constant 40 : index
    %160 = memref.load %arg1[%c40] : memref<64xi32, #tpu.memory_space<smem>>
    %161 = arith.index_cast %160 : i32 to index
    %c0_120 = arith.constant 0 : index
    %162 = vector.load %arg2[%161, %c0_120] : memref<50x128xf32, #tpu.memory_space<vmem>>, vector<1x128xf32>
    %c40_121 = arith.constant 40 : index
    %c0_122 = arith.constant 0 : index
    %163 = vector.load %arg9[%c40_121, %c0_122] : memref<64x128xf32, #tpu.memory_space<vmem>>, vector<1x128xf32>
    tpu.vector_store %arg9[%c40_121, %c0_122], %162 {strides = array<i32>} : memref<64x128xf32, #tpu.memory_space<vmem>>, vector<1x128xf32>,
    %c41 = arith.constant 41 : index
    %164 = memref.load %arg1[%c41] : memref<64xi32, #tpu.memory_space<smem>>
    %165 = arith.index_cast %164 : i32 to index
    %c0_123 = arith.constant 0 : index
    %166 = vector.load %arg2[%165, %c0_123] : memref<50x128xf32, #tpu.memory_space<vmem>>, vector<1x128xf32>
    %c41_124 = arith.constant 41 : index
    %c0_125 = arith.constant 0 : index
    %167 = vector.load %arg9[%c41_124, %c0_125] : memref<64x128xf32, #tpu.memory_space<vmem>>, vector<1x128xf32>
    tpu.vector_store %arg9[%c41_124, %c0_125], %166 {strides = array<i32>} : memref<64x128xf32, #tpu.memory_space<vmem>>, vector<1x128xf32>,
    %c42 = arith.constant 42 : index
    %168 = memref.load %arg1[%c42] : memref<64xi32, #tpu.memory_space<smem>>
    %169 = arith.index_cast %168 : i32 to index
    %c0_126 = arith.constant 0 : index
    %170 = vector.load %arg2[%169, %c0_126] : memref<50x128xf32, #tpu.memory_space<vmem>>, vector<1x128xf32>
    %c42_127 = arith.constant 42 : index
    %c0_128 = arith.constant 0 : index
    %171 = vector.load %arg9[%c42_127, %c0_128] : memref<64x128xf32, #tpu.memory_space<vmem>>, vector<1x128xf32>
    tpu.vector_store %arg9[%c42_127, %c0_128], %170 {strides = array<i32>} : memref<64x128xf32, #tpu.memory_space<vmem>>, vector<1x128xf32>,
    %c43 = arith.constant 43 : index
    %172 = memref.load %arg1[%c43] : memref<64xi32, #tpu.memory_space<smem>>
    %173 = arith.index_cast %172 : i32 to index
    %c0_129 = arith.constant 0 : index
    %174 = vector.load %arg2[%173, %c0_129] : memref<50x128xf32, #tpu.memory_space<vmem>>, vector<1x128xf32>
    %c43_130 = arith.constant 43 : index
    %c0_131 = arith.constant 0 : index
    %175 = vector.load %arg9[%c43_130, %c0_131] : memref<64x128xf32, #tpu.memory_space<vmem>>, vector<1x128xf32>
    tpu.vector_store %arg9[%c43_130, %c0_131], %174 {strides = array<i32>} : memref<64x128xf32, #tpu.memory_space<vmem>>, vector<1x128xf32>,
    %c44 = arith.constant 44 : index
    %176 = memref.load %arg1[%c44] : memref<64xi32, #tpu.memory_space<smem>>
    %177 = arith.index_cast %176 : i32 to index
    %c0_132 = arith.constant 0 : index
    %178 = vector.load %arg2[%177, %c0_132] : memref<50x128xf32, #tpu.memory_space<vmem>>, vector<1x128xf32>
    %c44_133 = arith.constant 44 : index
    %c0_134 = arith.constant 0 : index
    %179 = vector.load %arg9[%c44_133, %c0_134] : memref<64x128xf32, #tpu.memory_space<vmem>>, vector<1x128xf32>
    tpu.vector_store %arg9[%c44_133, %c0_134], %178 {strides = array<i32>} : memref<64x128xf32, #tpu.memory_space<vmem>>, vector<1x128xf32>,
    %c45 = arith.constant 45 : index
    %180 = memref.load %arg1[%c45] : memref<64xi32, #tpu.memory_space<smem>>
    %181 = arith.index_cast %180 : i32 to index
    %c0_135 = arith.constant 0 : index
    %182 = vector.load %arg2[%181, %c0_135] : memref<50x128xf32, #tpu.memory_space<vmem>>, vector<1x128xf32>
    %c45_136 = arith.constant 45 : index
    %c0_137 = arith.constant 0 : index
    %183 = vector.load %arg9[%c45_136, %c0_137] : memref<64x128xf32, #tpu.memory_space<vmem>>, vector<1x128xf32>
    tpu.vector_store %arg9[%c45_136, %c0_137], %182 {strides = array<i32>} : memref<64x128xf32, #tpu.memory_space<vmem>>, vector<1x128xf32>,
    %c46 = arith.constant 46 : index
    %184 = memref.load %arg1[%c46] : memref<64xi32, #tpu.memory_space<smem>>
    %185 = arith.index_cast %184 : i32 to index
    %c0_138 = arith.constant 0 : index
    %186 = vector.load %arg2[%185, %c0_138] : memref<50x128xf32, #tpu.memory_space<vmem>>, vector<1x128xf32>
    %c46_139 = arith.constant 46 : index
    %c0_140 = arith.constant 0 : index
    %187 = vector.load %arg9[%c46_139, %c0_140] : memref<64x128xf32, #tpu.memory_space<vmem>>, vector<1x128xf32>
    tpu.vector_store %arg9[%c46_139, %c0_140], %186 {strides = array<i32>} : memref<64x128xf32, #tpu.memory_space<vmem>>, vector<1x128xf32>,
    %c47 = arith.constant 47 : index
    %188 = memref.load %arg1[%c47] : memref<64xi32, #tpu.memory_space<smem>>
    %189 = arith.index_cast %188 : i32 to index
    %c0_141 = arith.constant 0 : index
    %190 = vector.load %arg2[%189, %c0_141] : memref<50x128xf32, #tpu.memory_space<vmem>>, vector<1x128xf32>
    %c47_142 = arith.constant 47 : index
    %c0_143 = arith.constant 0 : index
    %191 = vector.load %arg9[%c47_142, %c0_143] : memref<64x128xf32, #tpu.memory_space<vmem>>, vector<1x128xf32>
    tpu.vector_store %arg9[%c47_142, %c0_143], %190 {strides = array<i32>} : memref<64x128xf32, #tpu.memory_space<vmem>>, vector<1x128xf32>,
    %c48 = arith.constant 48 : index
    %192 = memref.load %arg1[%c48] : memref<64xi32, #tpu.memory_space<smem>>
    %193 = arith.index_cast %192 : i32 to index
    %c0_144 = arith.constant 0 : index
    %194 = vector.load %arg2[%193, %c0_144] : memref<50x128xf32, #tpu.memory_space<vmem>>, vector<1x128xf32>
    %c48_145 = arith.constant 48 : index
    %c0_146 = arith.constant 0 : index
    %195 = vector.load %arg9[%c48_145, %c0_146] : memref<64x128xf32, #tpu.memory_space<vmem>>, vector<1x128xf32>
    tpu.vector_store %arg9[%c48_145, %c0_146], %194 {strides = array<i32>} : memref<64x128xf32, #tpu.memory_space<vmem>>, vector<1x128xf32>,
    %c49 = arith.constant 49 : index
    %196 = memref.load %arg1[%c49] : memref<64xi32, #tpu.memory_space<smem>>
    %197 = arith.index_cast %196 : i32 to index
    %c0_147 = arith.constant 0 : index
    %198 = vector.load %arg2[%197, %c0_147] : memref<50x128xf32, #tpu.memory_space<vmem>>, vector<1x128xf32>
    %c49_148 = arith.constant 49 : index
    %c0_149 = arith.constant 0 : index
    %199 = vector.load %arg9[%c49_148, %c0_149] : memref<64x128xf32, #tpu.memory_space<vmem>>, vector<1x128xf32>
    tpu.vector_store %arg9[%c49_148, %c0_149], %198 {strides = array<i32>} : memref<64x128xf32, #tpu.memory_space<vmem>>, vector<1x128xf32>,
    %c50 = arith.constant 50 : index
    %200 = memref.load %arg1[%c50] : memref<64xi32, #tpu.memory_space<smem>>
    %201 = arith.index_cast %200 : i32 to index
    %c0_150 = arith.constant 0 : index
    %202 = vector.load %arg2[%201, %c0_150] : memref<50x128xf32, #tpu.memory_space<vmem>>, vector<1x128xf32>
    %c50_151 = arith.constant 50 : index
    %c0_152 = arith.constant 0 : index
    %203 = vector.load %arg9[%c50_151, %c0_152] : memref<64x128xf32, #tpu.memory_space<vmem>>, vector<1x128xf32>
    tpu.vector_store %arg9[%c50_151, %c0_152], %202 {strides = array<i32>} : memref<64x128xf32, #tpu.memory_space<vmem>>, vector<1x128xf32>,
    %c51 = arith.constant 51 : index
    %204 = memref.load %arg1[%c51] : memref<64xi32, #tpu.memory_space<smem>>
    %205 = arith.index_cast %204 : i32 to index
    %c0_153 = arith.constant 0 : index
    %206 = vector.load %arg2[%205, %c0_153] : memref<50x128xf32, #tpu.memory_space<vmem>>, vector<1x128xf32>
    %c51_154 = arith.constant 51 : index
    %c0_155 = arith.constant 0 : index
    %207 = vector.load %arg9[%c51_154, %c0_155] : memref<64x128xf32, #tpu.memory_space<vmem>>, vector<1x128xf32>
    tpu.vector_store %arg9[%c51_154, %c0_155], %206 {strides = array<i32>} : memref<64x128xf32, #tpu.memory_space<vmem>>, vector<1x128xf32>,
    %c52 = arith.constant 52 : index
    %208 = memref.load %arg1[%c52] : memref<64xi32, #tpu.memory_space<smem>>
    %209 = arith.index_cast %208 : i32 to index
    %c0_156 = arith.constant 0 : index
    %210 = vector.load %arg2[%209, %c0_156] : memref<50x128xf32, #tpu.memory_space<vmem>>, vector<1x128xf32>
    %c52_157 = arith.constant 52 : index
    %c0_158 = arith.constant 0 : index
    %211 = vector.load %arg9[%c52_157, %c0_158] : memref<64x128xf32, #tpu.memory_space<vmem>>, vector<1x128xf32>
    tpu.vector_store %arg9[%c52_157, %c0_158], %210 {strides = array<i32>} : memref<64x128xf32, #tpu.memory_space<vmem>>, vector<1x128xf32>,
    %c53 = arith.constant 53 : index
    %212 = memref.load %arg1[%c53] : memref<64xi32, #tpu.memory_space<smem>>
    %213 = arith.index_cast %212 : i32 to index
    %c0_159 = arith.constant 0 : index
    %214 = vector.load %arg2[%213, %c0_159] : memref<50x128xf32, #tpu.memory_space<vmem>>, vector<1x128xf32>
    %c53_160 = arith.constant 53 : index
    %c0_161 = arith.constant 0 : index
    %215 = vector.load %arg9[%c53_160, %c0_161] : memref<64x128xf32, #tpu.memory_space<vmem>>, vector<1x128xf32>
    tpu.vector_store %arg9[%c53_160, %c0_161], %214 {strides = array<i32>} : memref<64x128xf32, #tpu.memory_space<vmem>>, vector<1x128xf32>,
    %c54 = arith.constant 54 : index
    %216 = memref.load %arg1[%c54] : memref<64xi32, #tpu.memory_space<smem>>
    %217 = arith.index_cast %216 : i32 to index
    %c0_162 = arith.constant 0 : index
    %218 = vector.load %arg2[%217, %c0_162] : memref<50x128xf32, #tpu.memory_space<vmem>>, vector<1x128xf32>
    %c54_163 = arith.constant 54 : index
    %c0_164 = arith.constant 0 : index
    %219 = vector.load %arg9[%c54_163, %c0_164] : memref<64x128xf32, #tpu.memory_space<vmem>>, vector<1x128xf32>
    tpu.vector_store %arg9[%c54_163, %c0_164], %218 {strides = array<i32>} : memref<64x128xf32, #tpu.memory_space<vmem>>, vector<1x128xf32>,
    %c55 = arith.constant 55 : index
    %220 = memref.load %arg1[%c55] : memref<64xi32, #tpu.memory_space<smem>>
    %221 = arith.index_cast %220 : i32 to index
    %c0_165 = arith.constant 0 : index
    %222 = vector.load %arg2[%221, %c0_165] : memref<50x128xf32, #tpu.memory_space<vmem>>, vector<1x128xf32>
    %c55_166 = arith.constant 55 : index
    %c0_167 = arith.constant 0 : index
    %223 = vector.load %arg9[%c55_166, %c0_167] : memref<64x128xf32, #tpu.memory_space<vmem>>, vector<1x128xf32>
    tpu.vector_store %arg9[%c55_166, %c0_167], %222 {strides = array<i32>} : memref<64x128xf32, #tpu.memory_space<vmem>>, vector<1x128xf32>,
    %c56 = arith.constant 56 : index
    %224 = memref.load %arg1[%c56] : memref<64xi32, #tpu.memory_space<smem>>
    %225 = arith.index_cast %224 : i32 to index
    %c0_168 = arith.constant 0 : index
    %226 = vector.load %arg2[%225, %c0_168] : memref<50x128xf32, #tpu.memory_space<vmem>>, vector<1x128xf32>
    %c56_169 = arith.constant 56 : index
    %c0_170 = arith.constant 0 : index
    %227 = vector.load %arg9[%c56_169, %c0_170] : memref<64x128xf32, #tpu.memory_space<vmem>>, vector<1x128xf32>
    tpu.vector_store %arg9[%c56_169, %c0_170], %226 {strides = array<i32>} : memref<64x128xf32, #tpu.memory_space<vmem>>, vector<1x128xf32>,
    %c57 = arith.constant 57 : index
    %228 = memref.load %arg1[%c57] : memref<64xi32, #tpu.memory_space<smem>>
    %229 = arith.index_cast %228 : i32 to index
    %c0_171 = arith.constant 0 : index
    %230 = vector.load %arg2[%229, %c0_171] : memref<50x128xf32, #tpu.memory_space<vmem>>, vector<1x128xf32>
    %c57_172 = arith.constant 57 : index
    %c0_173 = arith.constant 0 : index
    %231 = vector.load %arg9[%c57_172, %c0_173] : memref<64x128xf32, #tpu.memory_space<vmem>>, vector<1x128xf32>
    tpu.vector_store %arg9[%c57_172, %c0_173], %230 {strides = array<i32>} : memref<64x128xf32, #tpu.memory_space<vmem>>, vector<1x128xf32>,
    %c58 = arith.constant 58 : index
    %232 = memref.load %arg1[%c58] : memref<64xi32, #tpu.memory_space<smem>>
    %233 = arith.index_cast %232 : i32 to index
    %c0_174 = arith.constant 0 : index
    %234 = vector.load %arg2[%233, %c0_174] : memref<50x128xf32, #tpu.memory_space<vmem>>, vector<1x128xf32>
    %c58_175 = arith.constant 58 : index
    %c0_176 = arith.constant 0 : index
    %235 = vector.load %arg9[%c58_175, %c0_176] : memref<64x128xf32, #tpu.memory_space<vmem>>, vector<1x128xf32>
    tpu.vector_store %arg9[%c58_175, %c0_176], %234 {strides = array<i32>} : memref<64x128xf32, #tpu.memory_space<vmem>>, vector<1x128xf32>,
    %c59 = arith.constant 59 : index
    %236 = memref.load %arg1[%c59] : memref<64xi32, #tpu.memory_space<smem>>
    %237 = arith.index_cast %236 : i32 to index
    %c0_177 = arith.constant 0 : index
    %238 = vector.load %arg2[%237, %c0_177] : memref<50x128xf32, #tpu.memory_space<vmem>>, vector<1x128xf32>
    %c59_178 = arith.constant 59 : index
    %c0_179 = arith.constant 0 : index
    %239 = vector.load %arg9[%c59_178, %c0_179] : memref<64x128xf32, #tpu.memory_space<vmem>>, vector<1x128xf32>
    tpu.vector_store %arg9[%c59_178, %c0_179], %238 {strides = array<i32>} : memref<64x128xf32, #tpu.memory_space<vmem>>, vector<1x128xf32>,
    %c60 = arith.constant 60 : index
    %240 = memref.load %arg1[%c60] : memref<64xi32, #tpu.memory_space<smem>>
    %241 = arith.index_cast %240 : i32 to index
    %c0_180 = arith.constant 0 : index
    %242 = vector.load %arg2[%241, %c0_180] : memref<50x128xf32, #tpu.memory_space<vmem>>, vector<1x128xf32>
    %c60_181 = arith.constant 60 : index
    %c0_182 = arith.constant 0 : index
    %243 = vector.load %arg9[%c60_181, %c0_182] : memref<64x128xf32, #tpu.memory_space<vmem>>, vector<1x128xf32>
    tpu.vector_store %arg9[%c60_181, %c0_182], %242 {strides = array<i32>} : memref<64x128xf32, #tpu.memory_space<vmem>>, vector<1x128xf32>,
    %c61 = arith.constant 61 : index
    %244 = memref.load %arg1[%c61] : memref<64xi32, #tpu.memory_space<smem>>
    %245 = arith.index_cast %244 : i32 to index
    %c0_183 = arith.constant 0 : index
    %246 = vector.load %arg2[%245, %c0_183] : memref<50x128xf32, #tpu.memory_space<vmem>>, vector<1x128xf32>
    %c61_184 = arith.constant 61 : index
    %c0_185 = arith.constant 0 : index
    %247 = vector.load %arg9[%c61_184, %c0_185] : memref<64x128xf32, #tpu.memory_space<vmem>>, vector<1x128xf32>
    tpu.vector_store %arg9[%c61_184, %c0_185], %246 {strides = array<i32>} : memref<64x128xf32, #tpu.memory_space<vmem>>, vector<1x128xf32>,
    %c62 = arith.constant 62 : index
    %248 = memref.load %arg1[%c62] : memref<64xi32, #tpu.memory_space<smem>>
    %249 = arith.index_cast %248 : i32 to index
    %c0_186 = arith.constant 0 : index
    %250 = vector.load %arg2[%249, %c0_186] : memref<50x128xf32, #tpu.memory_space<vmem>>, vector<1x128xf32>
    %c62_187 = arith.constant 62 : index
    %c0_188 = arith.constant 0 : index
    %251 = vector.load %arg9[%c62_187, %c0_188] : memref<64x128xf32, #tpu.memory_space<vmem>>, vector<1x128xf32>
    tpu.vector_store %arg9[%c62_187, %c0_188], %250 {strides = array<i32>} : memref<64x128xf32, #tpu.memory_space<vmem>>, vector<1x128xf32>,
    %c63 = arith.constant 63 : index
    %252 = memref.load %arg1[%c63] : memref<64xi32, #tpu.memory_space<smem>>
    %253 = arith.index_cast %252 : i32 to index
    %c0_189 = arith.constant 0 : index
    %254 = vector.load %arg2[%253, %c0_189] : memref<50x128xf32, #tpu.memory_space<vmem>>, vector<1x128xf32>
    %c63_190 = arith.constant 63 : index
    %c0_191 = arith.constant 0 : index
    %255 = vector.load %arg9[%c63_190, %c0_191] : memref<64x128xf32, #tpu.memory_space<vmem>>, vector<1x128xf32>
    tpu.vector_store %arg9[%c63_190, %c0_191], %254 {strides = array<i32>} : memref<64x128xf32, #tpu.memory_space<vmem>>, vector<1x128xf32>,
    %c0_192 = arith.constant 0 : index
    %c0_193 = arith.constant 0 : index
    %256 = vector.load %arg9[%c0_192, %c0_193] : memref<64x128xf32, #tpu.memory_space<vmem>>, vector<64x128xf32>
    %c0_194 = arith.constant 0 : index
    %c0_195 = arith.constant 0 : index
    %257 = vector.load %arg3[%c0_194, %c0_195] : memref<128x128xf32, #tpu.memory_space<vmem>>, vector<128x128xf32>
    %cst = arith.constant dense<0.000000e+00> : vector<64x128xf32>
    %258 = tpu.matmul %256, %257, %cst {dimension_numbers = #tpu.dot_dimension_numbers<[1], [0], [0], [1], [0, 0, 1, 1], [], []>} : vector<64x128xf32>, vector<128x128xf32>, vector<64x128xf32> -> vector<64x128xf32>
    %c0_196 = arith.constant 0 : index
    %c0_197 = arith.constant 0 : index
    %259 = vector.load %arg5[%c0_196, %c0_197] : memref<1x128xf32, #tpu.memory_space<vmem>>, vector<1x128xf32>
    %260 = vector.broadcast %259 : vector<1x128xf32> to vector<64x128xf32>
    %261 = arith.addf %258, %260 : vector<64x128xf32>
    %c0_198 = arith.constant 0 : index
    %c0_199 = arith.constant 0 : index
    %262 = vector.load %arg4[%c0_198, %c0_199] : memref<128x128xf32, #tpu.memory_space<vmem>>, vector<128x128xf32>
    %263 = vector.extract_strided_slice %261 {offsets = [0, 0], sizes = [8, 128], strides = [1, 1]} : vector<64x128xf32> to vector<8x128xf32>
    %264 = math.tanh %263 : vector<8x128xf32>
    %265 = vector.extract_strided_slice %261 {offsets = [8, 0], sizes = [8, 128], strides = [1, 1]} : vector<64x128xf32> to vector<8x128xf32>
    %cst_200 = arith.constant dense<0.000000e+00> : vector<8x128xf32>
    %266 = tpu.matmul %264, %262, %cst_200 {dimension_numbers = #tpu.dot_dimension_numbers<[1], [0], [0], [1], [0, 0, 1, 1], [], []>} : vector<8x128xf32>, vector<128x128xf32>, vector<8x128xf32> -> vector<8x128xf32>
    %267 = arith.addf %265, %266 : vector<8x128xf32>
    %268 = math.tanh %267 : vector<8x128xf32>
    %269 = vector.extract_strided_slice %261 {offsets = [16, 0], sizes = [8, 128], strides = [1, 1]} : vector<64x128xf32> to vector<8x128xf32>
    %cst_201 = arith.constant dense<0.000000e+00> : vector<8x128xf32>
    %270 = tpu.matmul %268, %262, %cst_201 {dimension_numbers = #tpu.dot_dimension_numbers<[1], [0], [0], [1], [0, 0, 1, 1], [], []>} : vector<8x128xf32>, vector<128x128xf32>, vector<8x128xf32> -> vector<8x128xf32>
    %271 = arith.addf %269, %270 : vector<8x128xf32>
    %272 = math.tanh %271 : vector<8x128xf32>
    %273 = vector.extract_strided_slice %261 {offsets = [24, 0], sizes = [8, 128], strides = [1, 1]} : vector<64x128xf32> to vector<8x128xf32>
    %cst_202 = arith.constant dense<0.000000e+00> : vector<8x128xf32>
    %274 = tpu.matmul %272, %262, %cst_202 {dimension_numbers = #tpu.dot_dimension_numbers<[1], [0], [0], [1], [0, 0, 1, 1], [], []>} : vector<8x128xf32>, vector<128x128xf32>, vector<8x128xf32> -> vector<8x128xf32>
    %275 = arith.addf %273, %274 : vector<8x128xf32>
    %276 = math.tanh %275 : vector<8x128xf32>
    %277 = vector.extract_strided_slice %261 {offsets = [32, 0], sizes = [8, 128], strides = [1, 1]} : vector<64x128xf32> to vector<8x128xf32>
    %cst_203 = arith.constant dense<0.000000e+00> : vector<8x128xf32>
    %278 = tpu.matmul %276, %262, %cst_203 {dimension_numbers = #tpu.dot_dimension_numbers<[1], [0], [0], [1], [0, 0, 1, 1], [], []>} : vector<8x128xf32>, vector<128x128xf32>, vector<8x128xf32> -> vector<8x128xf32>
    %279 = arith.addf %277, %278 : vector<8x128xf32>
    %280 = math.tanh %279 : vector<8x128xf32>
    %281 = vector.extract_strided_slice %261 {offsets = [40, 0], sizes = [8, 128], strides = [1, 1]} : vector<64x128xf32> to vector<8x128xf32>
    %cst_204 = arith.constant dense<0.000000e+00> : vector<8x128xf32>
    %282 = tpu.matmul %280, %262, %cst_204 {dimension_numbers = #tpu.dot_dimension_numbers<[1], [0], [0], [1], [0, 0, 1, 1], [], []>} : vector<8x128xf32>, vector<128x128xf32>, vector<8x128xf32> -> vector<8x128xf32>
    %283 = arith.addf %281, %282 : vector<8x128xf32>
    %284 = math.tanh %283 : vector<8x128xf32>
    %285 = vector.extract_strided_slice %261 {offsets = [48, 0], sizes = [8, 128], strides = [1, 1]} : vector<64x128xf32> to vector<8x128xf32>
    %cst_205 = arith.constant dense<0.000000e+00> : vector<8x128xf32>
    %286 = tpu.matmul %284, %262, %cst_205 {dimension_numbers = #tpu.dot_dimension_numbers<[1], [0], [0], [1], [0, 0, 1, 1], [], []>} : vector<8x128xf32>, vector<128x128xf32>, vector<8x128xf32> -> vector<8x128xf32>
    %287 = arith.addf %285, %286 : vector<8x128xf32>
    %288 = math.tanh %287 : vector<8x128xf32>
    %289 = vector.extract_strided_slice %261 {offsets = [56, 0], sizes = [8, 128], strides = [1, 1]} : vector<64x128xf32> to vector<8x128xf32>
    %cst_206 = arith.constant dense<0.000000e+00> : vector<8x128xf32>
    %290 = tpu.matmul %288, %262, %cst_206 {dimension_numbers = #tpu.dot_dimension_numbers<[1], [0], [0], [1], [0, 0, 1, 1], [], []>} : vector<8x128xf32>, vector<128x128xf32>, vector<8x128xf32> -> vector<8x128xf32>
    %291 = arith.addf %289, %290 : vector<8x128xf32>
    %292 = math.tanh %291 : vector<8x128xf32>
    %c0_207 = arith.constant 0 : index
    %c0_208 = arith.constant 0 : index
    %293 = vector.load %arg6[%c0_207, %c0_208] : memref<128x128xf32, #tpu.memory_space<vmem>>, vector<128x128xf32>
    %cst_209 = arith.constant dense<0.000000e+00> : vector<8x128xf32>
    %294 = tpu.matmul %292, %293, %cst_209 {dimension_numbers = #tpu.dot_dimension_numbers<[1], [0], [0], [1], [0, 0, 1, 1], [], []>} : vector<8x128xf32>, vector<128x128xf32>, vector<8x128xf32> -> vector<8x128xf32>
    %c0_210 = arith.constant 0 : index
    %c0_211 = arith.constant 0 : index
    %295 = vector.load %arg7[%c0_210, %c0_211] : memref<1x128xf32, #tpu.memory_space<vmem>>, vector<1x128xf32>
    %296 = vector.broadcast %295 : vector<1x128xf32> to vector<8x128xf32>
    %297 = arith.addf %294, %296 : vector<8x128xf32>
    %cst_212 = arith.constant 0.000000e+00 : f32
    %298 = vector.broadcast %cst_212 : f32 to vector<8x128xf32>
    %299 = arith.maximumf %297, %298 : vector<8x128xf32>
    %c0_213 = arith.constant 0 : index
    %c0_214 = arith.constant 0 : index
    %300 = vector.load %arg8[%c0_213, %c0_214] : memref<8x128xf32, #tpu.memory_space<vmem>>, vector<8x128xf32>
    tpu.vector_store %arg8[%c0_213, %c0_214], %299 {strides = array<i32>} : memref<8x128xf32, #tpu.memory_space<vmem>>, vector<8x128xf32>,
    return
  }
  func.func @transform_0(%arg0: i32, %arg1: memref<64xi32, #tpu.memory_space<smem>>) -> (i32, i32) {
    %c0_i32 = arith.constant 0 : i32
    %c0_i32_0 = arith.constant 0 : i32
    %c0_i32_1 = arith.constant 0 : i32
    return %c0_i32, %c0_i32_0 : i32, i32
  }
  func.func @transform_1(%arg0: i32, %arg1: memref<64xi32, #tpu.memory_space<smem>>) -> (i32, i32) {
    %c0_i32 = arith.constant 0 : i32
    %c0_i32_0 = arith.constant 0 : i32
    %c0_i32_1 = arith.constant 0 : i32
    return %c0_i32, %c0_i32_0 : i32, i32
  }
  func.func @transform_2(%arg0: i32, %arg1: memref<64xi32, #tpu.memory_space<smem>>) -> (i32, i32) {
    %c0_i32 = arith.constant 0 : i32
    %c0_i32_0 = arith.constant 0 : i32
    %c0_i32_1 = arith.constant 0 : i32
    return %c0_i32, %c0_i32_0 : i32, i32
  }
  func.func @transform_3(%arg0: i32, %arg1: memref<64xi32, #tpu.memory_space<smem>>) -> (i32, i32) {
    %c0_i32 = arith.constant 0 : i32
    %c0_i32_0 = arith.constant 0 : i32
    %c0_i32_1 = arith.constant 0 : i32
    return %c0_i32, %c0_i32_0 : i32, i32
  }
  func.func @transform_4(%arg0: i32, %arg1: memref<64xi32, #tpu.memory_space<smem>>) -> (i32, i32) {
    %c0_i32 = arith.constant 0 : i32
    %c0_i32_0 = arith.constant 0 : i32
    %c0_i32_1 = arith.constant 0 : i32
    return %c0_i32, %c0_i32_0 : i32, i32
  }
  func.func @transform_5(%arg0: i32, %arg1: memref<64xi32, #tpu.memory_space<smem>>) -> (i32, i32) {
    %c0_i32 = arith.constant 0 : i32
    %c0_i32_0 = arith.constant 0 : i32
    %c0_i32_1 = arith.constant 0 : i32
    return %c0_i32, %c0_i32_0 : i32, i32
  }
  func.func @transform_6(%arg0: i32, %arg1: memref<64xi32, #tpu.memory_space<smem>>) -> (i32, i32) {
    %c0_i32 = arith.constant 0 : i32
    %c0_i32_0 = arith.constant 0 : i32
    %c0_i32_1 = arith.constant 0 : i32
    return %c0_i32, %c0_i32_0 : i32, i32
  }
}

</mosaic_0001>

<llo_original>
// kernel: rnn_forward.1
$region0: #{rnn_forward.1}
  #allocation0 [shape = 'u32[]', space=smem, size = 0x4, offset = 0x4, fixed_abs, tag = 'smem constant byte address 0x4 - core index']
  #allocation1 [shape = 'u32[144,128]{1,0:T(1,128)}', space=vmem, size = 0x12000, scoped, tag = 'internal scratch']
  #allocation2 [shape = 'f32[64,128]{1,0:T(8,128)}', space=vmem, size = 0x8000, scoped, tag = 'scratch operand']
  #allocation3 [shape = 's32[1]{0}', space=sflag, size = 0x4, scoped, tag = 'scoped memory for rnn_forward.1']
  #allocation4 [shape = 'u8[512]{0}', space=smem, size = 0x200, scoped, tag = 'prefetched SMEM operand 0']
  %s0 = inlined_call_operand.vmem [shape: s32[64], index: 0, kind: input, shape index: {}]
  %s1 = inlined_call_operand.hbm [shape: f32[50,128], index: 1, kind: input, shape index: {}]
  %s2 = inlined_call_operand.hbm [shape: f32[128,128], index: 2, kind: input, shape index: {}]
  %s3 = inlined_call_operand.hbm [shape: f32[128,128], index: 3, kind: input, shape index: {}]
  %s4 = inlined_call_operand.vmem [shape: f32[1,128], index: 4, kind: input, shape index: {}]
  %s5 = inlined_call_operand.hbm [shape: f32[128,128], index: 5, kind: input, shape index: {}]
  %s6 = inlined_call_operand.vmem [shape: f32[1,128], index: 6, kind: input, shape index: {}]
  %s7 = inlined_call_operand.hbm [shape: f32[8,128], index: 7, kind: output, shape index: {}]
  %s8 = sld [smem:[#allocation0]]
  $region50: #{rnn_forward.1} parent=0
    _
  %s10 = ssub.s32 1, %s8
  %s11 = scalar_select 0, %s10, %s8
  %s12 = sshll.u32 %s0, 4
  %s13 = int_to_ptr.vmem [resolvable:$true] %s12
  %15 = dma.vmem_to_smem %s13, 16, [#allocation4], [#allocation3]
  %16 = dma.done [#allocation3], 16
  %17 = sfence
  $region1: #{rnn_forward.1} parent=0
    #allocation5 [shape = 'u8[28672]{0}', space=vmem, size = 0x7000, scoped, tag = 'input window, operand 1, single buffered']
    #allocation6 [shape = 's32[1]{0}', space=sflag, size = 0x4, scoped, tag = 'scoped memory for rnn_forward.1']
    #allocation7 [shape = 's32[1]{0}', space=sflag, size = 0x4, scoped, tag = 'scoped memory for rnn_forward.1']
    #allocation8 [shape = 'u8[65536]{0}', space=vmem, size = 0x10000, scoped, tag = 'input window, operand 2, single buffered']
    #allocation9 [shape = 's32[1]{0}', space=sflag, size = 0x4, scoped, tag = 'scoped memory for rnn_forward.1']
    #allocation10 [shape = 'u8[65536]{0}', space=vmem, size = 0x10000, scoped, tag = 'input window, operand 3, single buffered']
    #allocation11 [shape = 'u8[65536]{0}', space=vmem, size = 0x10000, scoped, tag = 'input window, operand 5, single buffered']
    #allocation12 [shape = 's32[1]{0}', space=sflag, size = 0x4, scoped, tag = 'scoped memory for rnn_forward.1']
    #allocation13 [shape = 'u8[4096]{0}', space=vmem, size = 0x1000, scoped, tag = 'output window, operand 0, single buffered']
    %18 = vsyncpa [#allocation6], 0
    %19 = vsyncpa [#allocation9], 0
    %20 = vsyncpa [#allocation12], 0
    %21 = vsyncpa [#allocation7], 0
    // Predicated region
    $region2: #{rnn_forward.1} parent=1 // pred_check
      _
    $region3: #{rnn_forward.1} parent=1 // pred_check_branch
      %23 = sbr.rel (0) target = $region5
    $region4: #{rnn_forward.1} parent=1 // pred_region
      %s25 = ssub.s32 896, 896
      %26 = vsyncadd [#allocation6], %s25
      %s27 = sshll.u32 [#allocation5], 4
      %s28 = int_to_ptr.vmem [resolvable:$true] %s27
      %33 = dma.hbm_to_vmem [thread:$0]  %s1, 896, %s28, [#allocation6], 128, 128, 8
    $region5: #{rnn_forward.1} parent=1 // pred_fallthru
      _
    // Predicated region
    $region6: #{rnn_forward.1} parent=1 // pred_check
      _
    $region7: #{rnn_forward.1} parent=1 // pred_check_branch
      %35 = sbr.rel (0) target = $region9
    $region8: #{rnn_forward.1} parent=1 // pred_region
      %s37 = ssub.s32 2048, 2048
      %38 = vsyncadd [#allocation9], %s37
      %s39 = sshll.u32 [#allocation8], 4
      %s40 = int_to_ptr.vmem [resolvable:$true] %s39
      %45 = dma.hbm_to_vmem [thread:$0]  %s2, 2048, %s40, [#allocation9], 128, 128, 8
    $region9: #{rnn_forward.1} parent=1 // pred_fallthru
      _
    // Predicated region
    $region10: #{rnn_forward.1} parent=1 // pred_check
      _
    $region11: #{rnn_forward.1} parent=1 // pred_check_branch
      %47 = sbr.rel (0) target = $region13
    $region12: #{rnn_forward.1} parent=1 // pred_region
      %s49 = ssub.s32 2048, 2048
      %50 = vsyncadd [#allocation9], %s49
      %s51 = sshll.u32 [#allocation10], 4
      %s52 = int_to_ptr.vmem [resolvable:$true] %s51
      %57 = dma.hbm_to_vmem [thread:$0]  %s3, 2048, %s52, [#allocation9], 128, 128, 8
    $region13: #{rnn_forward.1} parent=1 // pred_fallthru
      _
    // Predicated region
    $region14: #{rnn_forward.1} parent=1 // pred_check
      _
    $region15: #{rnn_forward.1} parent=1 // pred_check_branch
      %59 = sbr.rel (0) target = $region17
    $region16: #{rnn_forward.1} parent=1 // pred_region
      _
    $region17: #{rnn_forward.1} parent=1 // pred_fallthru
      _
    // Predicated region
    $region18: #{rnn_forward.1} parent=1 // pred_check
      _
    $region19: #{rnn_forward.1} parent=1 // pred_check_branch
      %61 = sbr.rel (0) target = $region21
    $region20: #{rnn_forward.1} parent=1 // pred_region
      %s63 = ssub.s32 2048, 2048
      %64 = vsyncadd [#allocation12], %s63
      %s65 = sshll.u32 [#allocation11], 4
      %s66 = int_to_ptr.vmem [resolvable:$true] %s65
      %71 = dma.hbm_to_vmem [thread:$0]  %s5, 2048, %s66, [#allocation12], 128, 128, 8
    $region21: #{rnn_forward.1} parent=1 // pred_fallthru
      _
    // Predicated region
    $region22: #{rnn_forward.1} parent=1 // pred_check
      _
    $region23: #{rnn_forward.1} parent=1 // pred_check_branch
      %73 = sbr.rel (0) target = $region25
    $region24: #{rnn_forward.1} parent=1 // pred_region
      _
    $region25: #{rnn_forward.1} parent=1 // pred_fallthru
      _
    // Predicated region
    $region26: #{rnn_forward.1} parent=1 // pred_check
      _
    $region27: #{rnn_forward.1} parent=1 // pred_check_branch
      %75 = sbr.rel (0) target = $region29
    $region28: #{rnn_forward.1} parent=1 // pred_region
      %76 = dma.done [#allocation6], 896
    $region29: #{rnn_forward.1} parent=1 // pred_fallthru
      _
    // Predicated region
    $region30: #{rnn_forward.1} parent=1 // pred_check
      _
    $region31: #{rnn_forward.1} parent=1 // pred_check_branch
      %78 = sbr.rel (0) target = $region33
    $region32: #{rnn_forward.1} parent=1 // pred_region
      %79 = dma.done [#allocation9], 2048
    $region33: #{rnn_forward.1} parent=1 // pred_fallthru
      _
    // Predicated region
    $region34: #{rnn_forward.1} parent=1 // pred_check
      _
    $region35: #{rnn_forward.1} parent=1 // pred_check_branch
      %81 = sbr.rel (0) target = $region37
    $region36: #{rnn_forward.1} parent=1 // pred_region
      %82 = dma.done [#allocation9], 2048
    $region37: #{rnn_forward.1} parent=1 // pred_fallthru
      _
    // Predicated region
    $region38: #{rnn_forward.1} parent=1 // pred_check
      _
    $region39: #{rnn_forward.1} parent=1 // pred_check_branch
      %84 = sbr.rel (0) target = $region41
    $region40: #{rnn_forward.1} parent=1 // pred_region
      %85 = dma.done [#allocation12], 2048
    $region41: #{rnn_forward.1} parent=1 // pred_fallthru
      _
    %s86 = sld [smem:[#allocation4]]
    %s87 = scalar_lea.vmem [#allocation5], %s86
    %v88 = vld [vmem:[%s87] sm:$0x1]
    %89 = vst [vmem:[#allocation2] sm:$0x1] %v88
    %s90 = sld [smem:[#allocation4 + $0x1]]
    %s91 = scalar_lea.vmem [#allocation5], %s90
    %v92 = vld [vmem:[%s91] sm:$0x1]
    %93 = vst [vmem:[#allocation2 + $0x1] sm:$0x1] %v92
    %s94 = sld [smem:[#allocation4 + $0x2]]
    %s95 = scalar_lea.vmem [#allocation5], %s94
    %v96 = vld [vmem:[%s95] sm:$0x1]
    %97 = vst [vmem:[#allocation2 + $0x2] sm:$0x1] %v96
    %s98 = sld [smem:[#allocation4 + $0x3]]
    %s99 = scalar_lea.vmem [#allocation5], %s98
    %v100 = vld [vmem:[%s99] sm:$0x1]
    %101 = vst [vmem:[#allocation2 + $0x3] sm:$0x1] %v100
    %s102 = sld [smem:[#allocation4 + $0x4]]
    %s103 = scalar_lea.vmem [#allocation5], %s102
    %v104 = vld [vmem:[%s103] sm:$0x1]
    %105 = vst [vmem:[#allocation2 + $0x4] sm:$0x1] %v104
    %s106 = sld [smem:[#allocation4 + $0x5]]
    %s107 = scalar_lea.vmem [#allocation5], %s106
    %v108 = vld [vmem:[%s107] sm:$0x1]
    %109 = vst [vmem:[#allocation2 + $0x5] sm:$0x1] %v108
    %s110 = sld [smem:[#allocation4 + $0x6]]
    %s111 = scalar_lea.vmem [#allocation5], %s110
    %v112 = vld [vmem:[%s111] sm:$0x1]
    %113 = vst [vmem:[#allocation2 + $0x6] sm:$0x1] %v112
    %s114 = sld [smem:[#allocation4 + $0x7]]
    %s115 = scalar_lea.vmem [#allocation5], %s114
    %v116 = vld [vmem:[%s115] sm:$0x1]
    %117 = vst [vmem:[#allocation2 + $0x7] sm:$0x1] %v116
    %s118 = sld [smem:[#allocation4 + $0x8]]
    %s119 = scalar_lea.vmem [#allocation5], %s118
    %v120 = vld [vmem:[%s119] sm:$0x1]
    %121 = vst [vmem:[#allocation2 + $0x8] sm:$0x1] %v120
    %s122 = sld [smem:[#allocation4 + $0x9]]
    %s123 = scalar_lea.vmem [#allocation5], %s122
    %v124 = vld [vmem:[%s123] sm:$0x1]
    %125 = vst [vmem:[#allocation2 + $0x9] sm:$0x1] %v124
    %s126 = sld [smem:[#allocation4 + $0xa]]
    %s127 = scalar_lea.vmem [#allocation5], %s126
    %v128 = vld [vmem:[%s127] sm:$0x1]
    %129 = vst [vmem:[#allocation2 + $0xa] sm:$0x1] %v128
    %s130 = sld [smem:[#allocation4 + $0xb]]
    %s131 = scalar_lea.vmem [#allocation5], %s130
    %v132 = vld [vmem:[%s131] sm:$0x1]
    %133 = vst [vmem:[#allocation2 + $0xb] sm:$0x1] %v132
    %s134 = sld [smem:[#allocation4 + $0xc]]
    %s135 = scalar_lea.vmem [#allocation5], %s134
    %v136 = vld [vmem:[%s135] sm:$0x1]
    %137 = vst [vmem:[#allocation2 + $0xc] sm:$0x1] %v136
    %s138 = sld [smem:[#allocation4 + $0xd]]
    %s139 = scalar_lea.vmem [#allocation5], %s138
    %v140 = vld [vmem:[%s139] sm:$0x1]
    %141 = vst [vmem:[#allocation2 + $0xd] sm:$0x1] %v140
    %s142 = sld [smem:[#allocation4 + $0xe]]
    %s143 = scalar_lea.vmem [#allocation5], %s142
    %v144 = vld [vmem:[%s143] sm:$0x1]
    %145 = vst [vmem:[#allocation2 + $0xe] sm:$0x1] %v144
    %s146 = sld [smem:[#allocation4 + $0xf]]
    %s147 = scalar_lea.vmem [#allocation5], %s146
    %v148 = vld [vmem:[%s147] sm:$0x1]
    %149 = vst [vmem:[#allocation2 + $0xf] sm:$0x1] %v148
    %s150 = sld [smem:[#allocation4 + $0x10]]
    %s151 = scalar_lea.vmem [#allocation5], %s150
    %v152 = vld [vmem:[%s151] sm:$0x1]
    %153 = vst [vmem:[#allocation2 + $0x10] sm:$0x1] %v152
    %s154 = sld [smem:[#allocation4 + $0x11]]
    %s155 = scalar_lea.vmem [#allocation5], %s154
    %v156 = vld [vmem:[%s155] sm:$0x1]
    %157 = vst [vmem:[#allocation2 + $0x11] sm:$0x1] %v156
    %s158 = sld [smem:[#allocation4 + $0x12]]
    %s159 = scalar_lea.vmem [#allocation5], %s158
    %v160 = vld [vmem:[%s159] sm:$0x1]
    %161 = vst [vmem:[#allocation2 + $0x12] sm:$0x1] %v160
    %s162 = sld [smem:[#allocation4 + $0x13]]
    %s163 = scalar_lea.vmem [#allocation5], %s162
    %v164 = vld [vmem:[%s163] sm:$0x1]
    %165 = vst [vmem:[#allocation2 + $0x13] sm:$0x1] %v164
    %s166 = sld [smem:[#allocation4 + $0x14]]
    %s167 = scalar_lea.vmem [#allocation5], %s166
    %v168 = vld [vmem:[%s167] sm:$0x1]
    %169 = vst [vmem:[#allocation2 + $0x14] sm:$0x1] %v168
    %s170 = sld [smem:[#allocation4 + $0x15]]
    %s171 = scalar_lea.vmem [#allocation5], %s170
    %v172 = vld [vmem:[%s171] sm:$0x1]
    %173 = vst [vmem:[#allocation2 + $0x15] sm:$0x1] %v172
    %s174 = sld [smem:[#allocation4 + $0x16]]
    %s175 = scalar_lea.vmem [#allocation5], %s174
    %v176 = vld [vmem:[%s175] sm:$0x1]
    %177 = vst [vmem:[#allocation2 + $0x16] sm:$0x1] %v176
    %s178 = sld [smem:[#allocation4 + $0x17]]
    %s179 = scalar_lea.vmem [#allocation5], %s178
    %v180 = vld [vmem:[%s179] sm:$0x1]
    %181 = vst [vmem:[#allocation2 + $0x17] sm:$0x1] %v180
    %s182 = sld [smem:[#allocation4 + $0x18]]
    %s183 = scalar_lea.vmem [#allocation5], %s182
    %v184 = vld [vmem:[%s183] sm:$0x1]
    %185 = vst [vmem:[#allocation2 + $0x18] sm:$0x1] %v184
    %s186 = sld [smem:[#allocation4 + $0x19]]
    %s187 = scalar_lea.vmem [#allocation5], %s186
    %v188 = vld [vmem:[%s187] sm:$0x1]
    %189 = vst [vmem:[#allocation2 + $0x19] sm:$0x1] %v188
    %s190 = sld [smem:[#allocation4 + $0x1a]]
    %s191 = scalar_lea.vmem [#allocation5], %s190
    %v192 = vld [vmem:[%s191] sm:$0x1]
    %193 = vst [vmem:[#allocation2 + $0x1a] sm:$0x1] %v192
    %s194 = sld [smem:[#allocation4 + $0x1b]]
    %s195 = scalar_lea.vmem [#allocation5], %s194
    %v196 = vld [vmem:[%s195] sm:$0x1]
    %197 = vst [vmem:[#allocation2 + $0x1b] sm:$0x1] %v196
    %s198 = sld [smem:[#allocation4 + $0x1c]]
    %s199 = scalar_lea.vmem [#allocation5], %s198
    %v200 = vld [vmem:[%s199] sm:$0x1]
    %201 = vst [vmem:[#allocation2 + $0x1c] sm:$0x1] %v200
    %s202 = sld [smem:[#allocation4 + $0x1d]]
    %s203 = scalar_lea.vmem [#allocation5], %s202
    %v204 = vld [vmem:[%s203] sm:$0x1]
    %205 = vst [vmem:[#allocation2 + $0x1d] sm:$0x1] %v204
    %s206 = sld [smem:[#allocation4 + $0x1e]]
    %s207 = scalar_lea.vmem [#allocation5], %s206
    %v208 = vld [vmem:[%s207] sm:$0x1]
    %209 = vst [vmem:[#allocation2 + $0x1e] sm:$0x1] %v208
    %s210 = sld [smem:[#allocation4 + $0x1f]]
    %s211 = scalar_lea.vmem [#allocation5], %s210
    %v212 = vld [vmem:[%s211] sm:$0x1]
    %213 = vst [vmem:[#allocation2 + $0x1f] sm:$0x1] %v212
    %s214 = sld [smem:[#allocation4 + $0x20]]
    %s215 = scalar_lea.vmem [#allocation5], %s214
    %v216 = vld [vmem:[%s215] sm:$0x1]
    %217 = vst [vmem:[#allocation2 + $0x20] sm:$0x1] %v216
    %s218 = sld [smem:[#allocation4 + $0x21]]
    %s219 = scalar_lea.vmem [#allocation5], %s218
    %v220 = vld [vmem:[%s219] sm:$0x1]
    %221 = vst [vmem:[#allocation2 + $0x21] sm:$0x1] %v220
    %s222 = sld [smem:[#allocation4 + $0x22]]
    %s223 = scalar_lea.vmem [#allocation5], %s222
    %v224 = vld [vmem:[%s223] sm:$0x1]
    %225 = vst [vmem:[#allocation2 + $0x22] sm:$0x1] %v224
    %s226 = sld [smem:[#allocation4 + $0x23]]
    %s227 = scalar_lea.vmem [#allocation5], %s226
    %v228 = vld [vmem:[%s227] sm:$0x1]
    %229 = vst [vmem:[#allocation2 + $0x23] sm:$0x1] %v228
    %s230 = sld [smem:[#allocation4 + $0x24]]
    %s231 = scalar_lea.vmem [#allocation5], %s230
    %v232 = vld [vmem:[%s231] sm:$0x1]
    %233 = vst [vmem:[#allocation2 + $0x24] sm:$0x1] %v232
    %s234 = sld [smem:[#allocation4 + $0x25]]
    %s235 = scalar_lea.vmem [#allocation5], %s234
    %v236 = vld [vmem:[%s235] sm:$0x1]
    %237 = vst [vmem:[#allocation2 + $0x25] sm:$0x1] %v236
    %s238 = sld [smem:[#allocation4 + $0x26]]
    %s239 = scalar_lea.vmem [#allocation5], %s238
    %v240 = vld [vmem:[%s239] sm:$0x1]
    %241 = vst [vmem:[#allocation2 + $0x26] sm:$0x1] %v240
    %s242 = sld [smem:[#allocation4 + $0x27]]
    %s243 = scalar_lea.vmem [#allocation5], %s242
    %v244 = vld [vmem:[%s243] sm:$0x1]
    %245 = vst [vmem:[#allocation2 + $0x27] sm:$0x1] %v244
    %s246 = sld [smem:[#allocation4 + $0x28]]
    %s247 = scalar_lea.vmem [#allocation5], %s246
    %v248 = vld [vmem:[%s247] sm:$0x1]
    %249 = vst [vmem:[#allocation2 + $0x28] sm:$0x1] %v248
    %s250 = sld [smem:[#allocation4 + $0x29]]
    %s251 = scalar_lea.vmem [#allocation5], %s250
    %v252 = vld [vmem:[%s251] sm:$0x1]
    %253 = vst [vmem:[#allocation2 + $0x29] sm:$0x1] %v252
    %s254 = sld [smem:[#allocation4 + $0x2a]]
    %s255 = scalar_lea.vmem [#allocation5], %s254
    %v256 = vld [vmem:[%s255] sm:$0x1]
    %257 = vst [vmem:[#allocation2 + $0x2a] sm:$0x1] %v256
    %s258 = sld [smem:[#allocation4 + $0x2b]]
    %s259 = scalar_lea.vmem [#allocation5], %s258
    %v260 = vld [vmem:[%s259] sm:$0x1]
    %261 = vst [vmem:[#allocation2 + $0x2b] sm:$0x1] %v260
    %s262 = sld [smem:[#allocation4 + $0x2c]]
    %s263 = scalar_lea.vmem [#allocation5], %s262
    %v264 = vld [vmem:[%s263] sm:$0x1]
    %265 = vst [vmem:[#allocation2 + $0x2c] sm:$0x1] %v264
    %s266 = sld [smem:[#allocation4 + $0x2d]]
    %s267 = scalar_lea.vmem [#allocation5], %s266
    %v268 = vld [vmem:[%s267] sm:$0x1]
    %269 = vst [vmem:[#allocation2 + $0x2d] sm:$0x1] %v268
    %s270 = sld [smem:[#allocation4 + $0x2e]]
    %s271 = scalar_lea.vmem [#allocation5], %s270
    %v272 = vld [vmem:[%s271] sm:$0x1]
    %273 = vst [vmem:[#allocation2 + $0x2e] sm:$0x1] %v272
    %s274 = sld [smem:[#allocation4 + $0x2f]]
    %s275 = scalar_lea.vmem [#allocation5], %s274
    %v276 = vld [vmem:[%s275] sm:$0x1]
    %277 = vst [vmem:[#allocation2 + $0x2f] sm:$0x1] %v276
    %s278 = sld [smem:[#allocation4 + $0x30]]
    %s279 = scalar_lea.vmem [#allocation5], %s278
    %v280 = vld [vmem:[%s279] sm:$0x1]
    %281 = vst [vmem:[#allocation2 + $0x30] sm:$0x1] %v280
    %s282 = sld [smem:[#allocation4 + $0x31]]
    %s283 = scalar_lea.vmem [#allocation5], %s282
    %v284 = vld [vmem:[%s283] sm:$0x1]
    %285 = vst [vmem:[#allocation2 + $0x31] sm:$0x1] %v284
    %s286 = sld [smem:[#allocation4 + $0x32]]
    %s287 = scalar_lea.vmem [#allocation5], %s286
    %v288 = vld [vmem:[%s287] sm:$0x1]
    %289 = vst [vmem:[#allocation2 + $0x32] sm:$0x1] %v288
    %s290 = sld [smem:[#allocation4 + $0x33]]
    %s291 = scalar_lea.vmem [#allocation5], %s290
    %v292 = vld [vmem:[%s291] sm:$0x1]
    %293 = vst [vmem:[#allocation2 + $0x33] sm:$0x1] %v292
    %s294 = sld [smem:[#allocation4 + $0x34]]
    %s295 = scalar_lea.vmem [#allocation5], %s294
    %v296 = vld [vmem:[%s295] sm:$0x1]
    %297 = vst [vmem:[#allocation2 + $0x34] sm:$0x1] %v296
    %s298 = sld [smem:[#allocation4 + $0x35]]
    %s299 = scalar_lea.vmem [#allocation5], %s298
    %v300 = vld [vmem:[%s299] sm:$0x1]
    %301 = vst [vmem:[#allocation2 + $0x35] sm:$0x1] %v300
    %s302 = sld [smem:[#allocation4 + $0x36]]
    %s303 = scalar_lea.vmem [#allocation5], %s302
    %v304 = vld [vmem:[%s303] sm:$0x1]
    %305 = vst [vmem:[#allocation2 + $0x36] sm:$0x1] %v304
    %s306 = sld [smem:[#allocation4 + $0x37]]
    %s307 = scalar_lea.vmem [#allocation5], %s306
    %v308 = vld [vmem:[%s307] sm:$0x1]
    %309 = vst [vmem:[#allocation2 + $0x37] sm:$0x1] %v308
    %s310 = sld [smem:[#allocation4 + $0x38]]
    %s311 = scalar_lea.vmem [#allocation5], %s310
    %v312 = vld [vmem:[%s311] sm:$0x1]
    %313 = vst [vmem:[#allocation2 + $0x38] sm:$0x1] %v312
    %s314 = sld [smem:[#allocation4 + $0x39]]
    %s315 = scalar_lea.vmem [#allocation5], %s314
    %v316 = vld [vmem:[%s315] sm:$0x1]
    %317 = vst [vmem:[#allocation2 + $0x39] sm:$0x1] %v316
    %s318 = sld [smem:[#allocation4 + $0x3a]]
    %s319 = scalar_lea.vmem [#allocation5], %s318
    %v320 = vld [vmem:[%s319] sm:$0x1]
    %321 = vst [vmem:[#allocation2 + $0x3a] sm:$0x1] %v320
    %s322 = sld [smem:[#allocation4 + $0x3b]]
    %s323 = scalar_lea.vmem [#allocation5], %s322
    %v324 = vld [vmem:[%s323] sm:$0x1]
    %325 = vst [vmem:[#allocation2 + $0x3b] sm:$0x1] %v324
    %s326 = sld [smem:[#allocation4 + $0x3c]]
    %s327 = scalar_lea.vmem [#allocation5], %s326
    %v328 = vld [vmem:[%s327] sm:$0x1]
    %329 = vst [vmem:[#allocation2 + $0x3c] sm:$0x1] %v328
    %s330 = sld [smem:[#allocation4 + $0x3d]]
    %s331 = scalar_lea.vmem [#allocation5], %s330
    %v332 = vld [vmem:[%s331] sm:$0x1]
    %333 = vst [vmem:[#allocation2 + $0x3d] sm:$0x1] %v332
    %s334 = sld [smem:[#allocation4 + $0x3e]]
    %s335 = scalar_lea.vmem [#allocation5], %s334
    %v336 = vld [vmem:[%s335] sm:$0x1]
    %337 = vst [vmem:[#allocation2 + $0x3e] sm:$0x1] %v336
    %s338 = sld [smem:[#allocation4 + $0x3f]]
    %s339 = scalar_lea.vmem [#allocation5], %s338
    %v340 = vld [vmem:[%s339] sm:$0x1]
    %341 = vst [vmem:[#allocation2 + $0x3f] sm:$0x1] %v340
    %v342 = vld [vmem:[#allocation2] sm:$0xff]
    %v343 = vld [vmem:[#allocation2 + $0x8] sm:$0xff]
    %v344 = vld [vmem:[#allocation2 + $0x10] sm:$0xff]
    %v345 = vld [vmem:[#allocation2 + $0x18] sm:$0xff]
    %v346 = vld [vmem:[#allocation2 + $0x20] sm:$0xff]
    %v347 = vld [vmem:[#allocation2 + $0x28] sm:$0xff]
    %v348 = vld [vmem:[#allocation2 + $0x30] sm:$0xff]
    %v349 = vld [vmem:[#allocation2 + $0x38] sm:$0xff]
    %v350 = vld [vmem:[#allocation8] sm:$0xff]
    %v351 = vld [vmem:[#allocation8 + $0x8] sm:$0xff]
    %v352 = vld [vmem:[#allocation8 + $0x10] sm:$0xff]
    %v353 = vld [vmem:[#allocation8 + $0x18] sm:$0xff]
    %v354 = vld [vmem:[#allocation8 + $0x20] sm:$0xff]
    %v355 = vld [vmem:[#allocation8 + $0x28] sm:$0xff]
    %v356 = vld [vmem:[#allocation8 + $0x30] sm:$0xff]
    %v357 = vld [vmem:[#allocation8 + $0x38] sm:$0xff]
    %v358 = vld [vmem:[#allocation8 + $0x40] sm:$0xff]
    %v359 = vld [vmem:[#allocation8 + $0x48] sm:$0xff]
    %v360 = vld [vmem:[#allocation8 + $0x50] sm:$0xff]
    %v361 = vld [vmem:[#allocation8 + $0x58] sm:$0xff]
    %v362 = vld [vmem:[#allocation8 + $0x60] sm:$0xff]
    %v363 = vld [vmem:[#allocation8 + $0x68] sm:$0xff]
    %v364 = vld [vmem:[#allocation8 + $0x70] sm:$0xff]
    %v365 = vld [vmem:[#allocation8 + $0x78] sm:$0xff]
    %v366 = vld [vmem:[%s4] sm:$0x1]
    %v368 = vlaneseq
    %v369 = vshrl.u32 %v368, 7
    %v370 = vsub.s32 0, %v369
    %v371 = vrot.slane %v366, %v370
    %373 = vmatprep.subr.mxu0 0.0
    %374 = vmatpush1.msra.mxu0 %v350
    %375 = vmatprep.subr.mxu0 0.0
    %376 = vmatpush1.msra.mxu0 %v351
    %377 = vmatprep.subr.mxu0 0.0
    %378 = vmatpush1.msra.mxu0 %v352
    %379 = vmatprep.subr.mxu0 0.0
    %380 = vmatpush1.msra.mxu0 %v353
    %381 = vmatprep.subr.mxu0 0.0
    %382 = vmatpush1.msra.mxu0 %v354
    %383 = vmatprep.subr.mxu0 0.0
    %384 = vmatpush1.msra.mxu0 %v355
    %385 = vmatprep.subr.mxu0 0.0
    %386 = vmatpush1.msra.mxu0 %v356
    %387 = vmatprep.subr.mxu0 0.0
    %388 = vmatpush1.msra.mxu0 %v357
    %389 = vmatprep.subr.mxu0 0.0
    %390 = vmatpush1.msra.mxu0 %v358
    %391 = vmatprep.subr.mxu0 0.0
    %392 = vmatpush1.msra.mxu0 %v359
    %393 = vmatprep.subr.mxu0 0.0
    %394 = vmatpush1.msra.mxu0 %v360
    %395 = vmatprep.subr.mxu0 0.0
    %396 = vmatpush1.msra.mxu0 %v361
    %397 = vmatprep.subr.mxu0 0.0
    %398 = vmatpush1.msra.mxu0 %v362
    %399 = vmatprep.subr.mxu0 0.0
    %400 = vmatpush1.msra.mxu0 %v363
    %401 = vmatprep.subr.mxu0 0.0
    %402 = vmatpush1.msra.mxu0 %v364
    %403 = vmatprep.subr.mxu0 0.0
    %404 = vmatpush1.msra.mxu0 %v365
    %405 = vmatprep.subr.mxu0 0.0
    %406 = vmatpush1.msra.mxu0 0.0
    %407 = vmatprep.subr.mxu0 0.0
    %408 = vmatpush1.msra.mxu0 0.0
    %409 = vmatprep.subr.mxu0 0.0
    %410 = vmatpush1.msra.mxu0 0.0
    %411 = vmatprep.subr.mxu0 0.0
    %412 = vmatpush1.msra.mxu0 0.0
    %413 = vmatprep.subr.mxu0 0.0
    %414 = vmatpush1.msra.mxu0 0.0
    %415 = vmatprep.subr.mxu0 0.0
    %416 = vmatpush1.msra.mxu0 0.0
    %417 = vmatprep.subr.mxu0 0.0
    %418 = vmatpush1.msra.mxu0 0.0
    %419 = vmatprep.subr.mxu0 0.0
    %420 = vmatpush1.msra.mxu0 0.0
    %421 = vmatprep.subr.mxu0 0.0
    %422 = vmatpush1.msra.mxu0 0.0
    %423 = vmatprep.subr.mxu0 0.0
    %424 = vmatpush1.msra.mxu0 0.0
    %425 = vmatprep.subr.mxu0 0.0
    %426 = vmatpush1.msra.mxu0 0.0
    %427 = vmatprep.subr.mxu0 0.0
    %428 = vmatpush1.msra.mxu0 0.0
    %429 = vmatprep.subr.mxu0 0.0
    %430 = vmatpush1.msra.mxu0 0.0
    %431 = vmatprep.subr.mxu0 0.0
    %432 = vmatpush1.msra.mxu0 0.0
    %433 = vmatprep.subr.mxu0 0.0
    %434 = vmatpush1.msra.mxu0 0.0
    %435 = vmatprep.subr.mxu0 0.0
    %436 = vmatpush1.msra.mxu0 0.0
    %437 = vmatprep.mubr.f32.mxu0 0.0
    %438 = vmatmul.mubr.f32.gmra.mrb[0].mxu0 %v342
    %v439 = vpop.f32.mrb[0].mxu0
    %v440 = vadd.f32 %v371, %v439
    %v441 = vpop.f32.mrb[0].mxu0
    %442 = vmatprep.mubr.f32.mxu0 0.0
    %443 = vmatmul.mubr.f32.gmra.mrb[0].mxu0 %v343
    %v444 = vpop.f32.mrb[0].mxu0
    %v445 = vadd.f32 %v371, %v444
    %v446 = vpop.f32.mrb[0].mxu0
    %447 = vmatprep.mubr.f32.mxu0 0.0
    %448 = vmatmul.mubr.f32.gmra.mrb[0].mxu0 %v344
    %v449 = vpop.f32.mrb[0].mxu0
    %v450 = vadd.f32 %v371, %v449
    %v451 = vpop.f32.mrb[0].mxu0
    %452 = vmatprep.mubr.f32.mxu0 0.0
    %453 = vmatmul.mubr.f32.gmra.mrb[0].mxu0 %v345
    %v454 = vpop.f32.mrb[0].mxu0
    %v455 = vadd.f32 %v371, %v454
    %v456 = vpop.f32.mrb[0].mxu0
    %457 = vmatprep.mubr.f32.mxu0 0.0
    %458 = vmatmul.mubr.f32.gmra.mrb[0].mxu0 %v346
    %v459 = vpop.f32.mrb[0].mxu0
    %v460 = vadd.f32 %v371, %v459
    %v461 = vpop.f32.mrb[0].mxu0
    %462 = vmatprep.mubr.f32.mxu0 0.0
    %463 = vmatmul.mubr.f32.gmra.mrb[0].mxu0 %v347
    %v464 = vpop.f32.mrb[0].mxu0
    %v465 = vadd.f32 %v371, %v464
    %v466 = vpop.f32.mrb[0].mxu0
    %467 = vmatprep.mubr.f32.mxu0 0.0
    %468 = vmatmul.mubr.f32.gmra.mrb[0].mxu0 %v348
    %v469 = vpop.f32.mrb[0].mxu0
    %v470 = vadd.f32 %v371, %v469
    %v471 = vpop.f32.mrb[0].mxu0
    %472 = vmatprep.mubr.f32.mxu0 0.0
    %473 = vmatmul.mubr.f32.gmra.mrb[0].mxu0 %v349
    %v474 = vpop.f32.mrb[0].mxu0
    %v475 = vadd.f32 %v371, %v474
    %v476 = vpop.f32.mrb[0].mxu0
    %477 = vdwg.mxu0
    %v478 = vld [vmem:[#allocation10] sm:$0xff]
    %v479 = vld [vmem:[#allocation10 + $0x8] sm:$0xff]
    %v480 = vld [vmem:[#allocation10 + $0x10] sm:$0xff]
    %v481 = vld [vmem:[#allocation10 + $0x18] sm:$0xff]
    %v482 = vld [vmem:[#allocation10 + $0x20] sm:$0xff]
    %v483 = vld [vmem:[#allocation10 + $0x28] sm:$0xff]
    %v484 = vld [vmem:[#allocation10 + $0x30] sm:$0xff]
    %v485 = vld [vmem:[#allocation10 + $0x38] sm:$0xff]
    %v486 = vld [vmem:[#allocation10 + $0x40] sm:$0xff]
    %v487 = vld [vmem:[#allocation10 + $0x48] sm:$0xff]
    %v488 = vld [vmem:[#allocation10 + $0x50] sm:$0xff]
    %v489 = vld [vmem:[#allocation10 + $0x58] sm:$0xff]
    %v490 = vld [vmem:[#allocation10 + $0x60] sm:$0xff]
    %v491 = vld [vmem:[#allocation10 + $0x68] sm:$0xff]
    %v492 = vld [vmem:[#allocation10 + $0x70] sm:$0xff]
    %v493 = vld [vmem:[#allocation10 + $0x78] sm:$0xff]
    %v494 = vtanh.pop %v440
    %495 = vmatprep.subr.mxu0 0.0
    %496 = vmatpush1.msra.mxu0 %v478
    %497 = vmatprep.subr.mxu0 0.0
    %498 = vmatpush1.msra.mxu0 %v479
    %499 = vmatprep.subr.mxu0 0.0
    %500 = vmatpush1.msra.mxu0 %v480
    %501 = vmatprep.subr.mxu0 0.0
    %502 = vmatpush1.msra.mxu0 %v481
    %503 = vmatprep.subr.mxu0 0.0
    %504 = vmatpush1.msra.mxu0 %v482
    %505 = vmatprep.subr.mxu0 0.0
    %506 = vmatpush1.msra.mxu0 %v483
    %507 = vmatprep.subr.mxu0 0.0
    %508 = vmatpush1.msra.mxu0 %v484
    %509 = vmatprep.subr.mxu0 0.0
    %510 = vmatpush1.msra.mxu0 %v485
    %511 = vmatprep.subr.mxu0 0.0
    %512 = vmatpush1.msra.mxu0 %v486
    %513 = vmatprep.subr.mxu0 0.0
    %514 = vmatpush1.msra.mxu0 %v487
    %515 = vmatprep.subr.mxu0 0.0
    %516 = vmatpush1.msra.mxu0 %v488
    %517 = vmatprep.subr.mxu0 0.0
    %518 = vmatpush1.msra.mxu0 %v489
    %519 = vmatprep.subr.mxu0 0.0
    %520 = vmatpush1.msra.mxu0 %v490
    %521 = vmatprep.subr.mxu0 0.0
    %522 = vmatpush1.msra.mxu0 %v491
    %523 = vmatprep.subr.mxu0 0.0
    %524 = vmatpush1.msra.mxu0 %v492
    %525 = vmatprep.subr.mxu0 0.0
    %526 = vmatpush1.msra.mxu0 %v493
    %527 = vmatprep.subr.mxu0 0.0
    %528 = vmatpush1.msra.mxu0 0.0
    %529 = vmatprep.subr.mxu0 0.0
    %530 = vmatpush1.msra.mxu0 0.0
    %531 = vmatprep.subr.mxu0 0.0
    %532 = vmatpush1.msra.mxu0 0.0
    %533 = vmatprep.subr.mxu0 0.0
    %534 = vmatpush1.msra.mxu0 0.0
    %535 = vmatprep.subr.mxu0 0.0
    %536 = vmatpush1.msra.mxu0 0.0
    %537 = vmatprep.subr.mxu0 0.0
    %538 = vmatpush1.msra.mxu0 0.0
    %539 = vmatprep.subr.mxu0 0.0
    %540 = vmatpush1.msra.mxu0 0.0
    %541 = vmatprep.subr.mxu0 0.0
    %542 = vmatpush1.msra.mxu0 0.0
    %543 = vmatprep.subr.mxu0 0.0
    %544 = vmatpush1.msra.mxu0 0.0
    %545 = vmatprep.subr.mxu0 0.0
    %546 = vmatpush1.msra.mxu0 0.0
    %547 = vmatprep.subr.mxu0 0.0
    %548 = vmatpush1.msra.mxu0 0.0
    %549 = vmatprep.subr.mxu0 0.0
    %550 = vmatpush1.msra.mxu0 0.0
    %551 = vmatprep.subr.mxu0 0.0
    %552 = vmatpush1.msra.mxu0 0.0
    %553 = vmatprep.subr.mxu0 0.0
    %554 = vmatpush1.msra.mxu0 0.0
    %555 = vmatprep.subr.mxu0 0.0
    %556 = vmatpush1.msra.mxu0 0.0
    %557 = vmatprep.subr.mxu0 0.0
    %558 = vmatpush1.msra.mxu0 0.0
    %559 = vmatprep.mubr.f32.mxu0 0.0
    %560 = vmatmul.mubr.f32.gmra.mrb[0].mxu0 %v494
    %v561 = vpop.f32.mrb[0].mxu0
    %v562 = vadd.f32 0.0, %v561
    %v563 = vpop.f32.mrb[0].mxu0
    %564 = vdwg.mxu0
    %v565 = vadd.f32 %v445, %v562
    %v566 = vtanh.pop %v565
    %567 = vmatprep.subr.mxu0 0.0
    %568 = vmatpush1.msra.mxu0 %v478
    %569 = vmatprep.subr.mxu0 0.0
    %570 = vmatpush1.msra.mxu0 %v479
    %571 = vmatprep.subr.mxu0 0.0
    %572 = vmatpush1.msra.mxu0 %v480
    %573 = vmatprep.subr.mxu0 0.0
    %574 = vmatpush1.msra.mxu0 %v481
    %575 = vmatprep.subr.mxu0 0.0
    %576 = vmatpush1.msra.mxu0 %v482
    %577 = vmatprep.subr.mxu0 0.0
    %578 = vmatpush1.msra.mxu0 %v483
    %579 = vmatprep.subr.mxu0 0.0
    %580 = vmatpush1.msra.mxu0 %v484
    %581 = vmatprep.subr.mxu0 0.0
    %582 = vmatpush1.msra.mxu0 %v485
    %583 = vmatprep.subr.mxu0 0.0
    %584 = vmatpush1.msra.mxu0 %v486
    %585 = vmatprep.subr.mxu0 0.0
    %586 = vmatpush1.msra.mxu0 %v487
    %587 = vmatprep.subr.mxu0 0.0
    %588 = vmatpush1.msra.mxu0 %v488
    %589 = vmatprep.subr.mxu0 0.0
    %590 = vmatpush1.msra.mxu0 %v489
    %591 = vmatprep.subr.mxu0 0.0
    %592 = vmatpush1.msra.mxu0 %v490
    %593 = vmatprep.subr.mxu0 0.0
    %594 = vmatpush1.msra.mxu0 %v491
    %595 = vmatprep.subr.mxu0 0.0
    %596 = vmatpush1.msra.mxu0 %v492
    %597 = vmatprep.subr.mxu0 0.0
    %598 = vmatpush1.msra.mxu0 %v493
    %599 = vmatprep.subr.mxu0 0.0
    %600 = vmatpush1.msra.mxu0 0.0
    %601 = vmatprep.subr.mxu0 0.0
    %602 = vmatpush1.msra.mxu0 0.0
    %603 = vmatprep.subr.mxu0 0.0
    %604 = vmatpush1.msra.mxu0 0.0
    %605 = vmatprep.subr.mxu0 0.0
    %606 = vmatpush1.msra.mxu0 0.0
    %607 = vmatprep.subr.mxu0 0.0
    %608 = vmatpush1.msra.mxu0 0.0
    %609 = vmatprep.subr.mxu0 0.0
    %610 = vmatpush1.msra.mxu0 0.0
    %611 = vmatprep.subr.mxu0 0.0
    %612 = vmatpush1.msra.mxu0 0.0
    %613 = vmatprep.subr.mxu0 0.0
    %614 = vmatpush1.msra.mxu0 0.0
    %615 = vmatprep.subr.mxu0 0.0
    %616 = vmatpush1.msra.mxu0 0.0
    %617 = vmatprep.subr.mxu0 0.0
    %618 = vmatpush1.msra.mxu0 0.0
    %619 = vmatprep.subr.mxu0 0.0
    %620 = vmatpush1.msra.mxu0 0.0
    %621 = vmatprep.subr.mxu0 0.0
    %622 = vmatpush1.msra.mxu0 0.0
    %623 = vmatprep.subr.mxu0 0.0
    %624 = vmatpush1.msra.mxu0 0.0
    %625 = vmatprep.subr.mxu0 0.0
    %626 = vmatpush1.msra.mxu0 0.0
    %627 = vmatprep.subr.mxu0 0.0
    %628 = vmatpush1.msra.mxu0 0.0
    %629 = vmatprep.subr.mxu0 0.0
    %630 = vmatpush1.msra.mxu0 0.0
    %631 = vmatprep.mubr.f32.mxu0 0.0
    %632 = vmatmul.mubr.f32.gmra.mrb[0].mxu0 %v566
    %v633 = vpop.f32.mrb[0].mxu0
    %v634 = vadd.f32 0.0, %v633
    %v635 = vpop.f32.mrb[0].mxu0
    %636 = vdwg.mxu0
    %v637 = vadd.f32 %v450, %v634
    %v638 = vtanh.pop %v637
    %639 = vmatprep.subr.mxu0 0.0
    %640 = vmatpush1.msra.mxu0 %v478
    %641 = vmatprep.subr.mxu0 0.0
    %642 = vmatpush1.msra.mxu0 %v479
    %643 = vmatprep.subr.mxu0 0.0
    %644 = vmatpush1.msra.mxu0 %v480
    %645 = vmatprep.subr.mxu0 0.0
    %646 = vmatpush1.msra.mxu0 %v481
    %647 = vmatprep.subr.mxu0 0.0
    %648 = vmatpush1.msra.mxu0 %v482
    %649 = vmatprep.subr.mxu0 0.0
    %650 = vmatpush1.msra.mxu0 %v483
    %651 = vmatprep.subr.mxu0 0.0
    %652 = vmatpush1.msra.mxu0 %v484
    %653 = vmatprep.subr.mxu0 0.0
    %654 = vmatpush1.msra.mxu0 %v485
    %655 = vmatprep.subr.mxu0 0.0
    %656 = vmatpush1.msra.mxu0 %v486
    %657 = vmatprep.subr.mxu0 0.0
    %658 = vmatpush1.msra.mxu0 %v487
    %659 = vmatprep.subr.mxu0 0.0
    %660 = vmatpush1.msra.mxu0 %v488
    %661 = vmatprep.subr.mxu0 0.0
    %662 = vmatpush1.msra.mxu0 %v489
    %663 = vmatprep.subr.mxu0 0.0
    %664 = vmatpush1.msra.mxu0 %v490
    %665 = vmatprep.subr.mxu0 0.0
    %666 = vmatpush1.msra.mxu0 %v491
    %667 = vmatprep.subr.mxu0 0.0
    %668 = vmatpush1.msra.mxu0 %v492
    %669 = vmatprep.subr.mxu0 0.0
    %670 = vmatpush1.msra.mxu0 %v493
    %671 = vmatprep.subr.mxu0 0.0
    %672 = vmatpush1.msra.mxu0 0.0
    %673 = vmatprep.subr.mxu0 0.0
    %674 = vmatpush1.msra.mxu0 0.0
    %675 = vmatprep.subr.mxu0 0.0
    %676 = vmatpush1.msra.mxu0 0.0
    %677 = vmatprep.subr.mxu0 0.0
    %678 = vmatpush1.msra.mxu0 0.0
    %679 = vmatprep.subr.mxu0 0.0
    %680 = vmatpush1.msra.mxu0 0.0
    %681 = vmatprep.subr.mxu0 0.0
    %682 = vmatpush1.msra.mxu0 0.0
    %683 = vmatprep.subr.mxu0 0.0
    %684 = vmatpush1.msra.mxu0 0.0
    %685 = vmatprep.subr.mxu0 0.0
    %686 = vmatpush1.msra.mxu0 0.0
    %687 = vmatprep.subr.mxu0 0.0
    %688 = vmatpush1.msra.mxu0 0.0
    %689 = vmatprep.subr.mxu0 0.0
    %690 = vmatpush1.msra.mxu0 0.0
    %691 = vmatprep.subr.mxu0 0.0
    %692 = vmatpush1.msra.mxu0 0.0
    %693 = vmatprep.subr.mxu0 0.0
    %694 = vmatpush1.msra.mxu0 0.0
    %695 = vmatprep.subr.mxu0 0.0
    %696 = vmatpush1.msra.mxu0 0.0
    %697 = vmatprep.subr.mxu0 0.0
    %698 = vmatpush1.msra.mxu0 0.0
    %699 = vmatprep.subr.mxu0 0.0
    %700 = vmatpush1.msra.mxu0 0.0
    %701 = vmatprep.subr.mxu0 0.0
    %702 = vmatpush1.msra.mxu0 0.0
    %703 = vmatprep.mubr.f32.mxu0 0.0
    %704 = vmatmul.mubr.f32.gmra.mrb[0].mxu0 %v638
    %v705 = vpop.f32.mrb[0].mxu0
    %v706 = vadd.f32 0.0, %v705
    %v707 = vpop.f32.mrb[0].mxu0
    %708 = vdwg.mxu0
    %v709 = vadd.f32 %v455, %v706
    %v710 = vtanh.pop %v709
    %711 = vmatprep.subr.mxu0 0.0
    %712 = vmatpush1.msra.mxu0 %v478
    %713 = vmatprep.subr.mxu0 0.0
    %714 = vmatpush1.msra.mxu0 %v479
    %715 = vmatprep.subr.mxu0 0.0
    %716 = vmatpush1.msra.mxu0 %v480
    %717 = vmatprep.subr.mxu0 0.0
    %718 = vmatpush1.msra.mxu0 %v481
    %719 = vmatprep.subr.mxu0 0.0
    %720 = vmatpush1.msra.mxu0 %v482
    %721 = vmatprep.subr.mxu0 0.0
    %722 = vmatpush1.msra.mxu0 %v483
    %723 = vmatprep.subr.mxu0 0.0
    %724 = vmatpush1.msra.mxu0 %v484
    %725 = vmatprep.subr.mxu0 0.0
    %726 = vmatpush1.msra.mxu0 %v485
    %727 = vmatprep.subr.mxu0 0.0
    %728 = vmatpush1.msra.mxu0 %v486
    %729 = vmatprep.subr.mxu0 0.0
    %730 = vmatpush1.msra.mxu0 %v487
    %731 = vmatprep.subr.mxu0 0.0
    %732 = vmatpush1.msra.mxu0 %v488
    %733 = vmatprep.subr.mxu0 0.0
    %734 = vmatpush1.msra.mxu0 %v489
    %735 = vmatprep.subr.mxu0 0.0
    %736 = vmatpush1.msra.mxu0 %v490
    %737 = vmatprep.subr.mxu0 0.0
    %738 = vmatpush1.msra.mxu0 %v491
    %739 = vmatprep.subr.mxu0 0.0
    %740 = vmatpush1.msra.mxu0 %v492
    %741 = vmatprep.subr.mxu0 0.0
    %742 = vmatpush1.msra.mxu0 %v493
    %743 = vmatprep.subr.mxu0 0.0
    %744 = vmatpush1.msra.mxu0 0.0
    %745 = vmatprep.subr.mxu0 0.0
    %746 = vmatpush1.msra.mxu0 0.0
    %747 = vmatprep.subr.mxu0 0.0
    %748 = vmatpush1.msra.mxu0 0.0
    %749 = vmatprep.subr.mxu0 0.0
    %750 = vmatpush1.msra.mxu0 0.0
    %751 = vmatprep.subr.mxu0 0.0
    %752 = vmatpush1.msra.mxu0 0.0
    %753 = vmatprep.subr.mxu0 0.0
    %754 = vmatpush1.msra.mxu0 0.0
    %755 = vmatprep.subr.mxu0 0.0
    %756 = vmatpush1.msra.mxu0 0.0
    %757 = vmatprep.subr.mxu0 0.0
    %758 = vmatpush1.msra.mxu0 0.0
    %759 = vmatprep.subr.mxu0 0.0
    %760 = vmatpush1.msra.mxu0 0.0
    %761 = vmatprep.subr.mxu0 0.0
    %762 = vmatpush1.msra.mxu0 0.0
    %763 = vmatprep.subr.mxu0 0.0
    %764 = vmatpush1.msra.mxu0 0.0
    %765 = vmatprep.subr.mxu0 0.0
    %766 = vmatpush1.msra.mxu0 0.0
    %767 = vmatprep.subr.mxu0 0.0
    %768 = vmatpush1.msra.mxu0 0.0
    %769 = vmatprep.subr.mxu0 0.0
    %770 = vmatpush1.msra.mxu0 0.0
    %771 = vmatprep.subr.mxu0 0.0
    %772 = vmatpush1.msra.mxu0 0.0
    %773 = vmatprep.subr.mxu0 0.0
    %774 = vmatpush1.msra.mxu0 0.0
    %775 = vmatprep.mubr.f32.mxu0 0.0
    %776 = vmatmul.mubr.f32.gmra.mrb[0].mxu0 %v710
    %v777 = vpop.f32.mrb[0].mxu0
    %v778 = vadd.f32 0.0, %v777
    %v779 = vpop.f32.mrb[0].mxu0
    %780 = vdwg.mxu0
    %v781 = vadd.f32 %v460, %v778
    %v782 = vtanh.pop %v781
    %783 = vmatprep.subr.mxu0 0.0
    %784 = vmatpush1.msra.mxu0 %v478
    %785 = vmatprep.subr.mxu0 0.0
    %786 = vmatpush1.msra.mxu0 %v479
    %787 = vmatprep.subr.mxu0 0.0
    %788 = vmatpush1.msra.mxu0 %v480
    %789 = vmatprep.subr.mxu0 0.0
    %790 = vmatpush1.msra.mxu0 %v481
    %791 = vmatprep.subr.mxu0 0.0
    %792 = vmatpush1.msra.mxu0 %v482
    %793 = vmatprep.subr.mxu0 0.0
    %794 = vmatpush1.msra.mxu0 %v483
    %795 = vmatprep.subr.mxu0 0.0
    %796 = vmatpush1.msra.mxu0 %v484
    %797 = vmatprep.subr.mxu0 0.0
    %798 = vmatpush1.msra.mxu0 %v485
    %799 = vmatprep.subr.mxu0 0.0
    %800 = vmatpush1.msra.mxu0 %v486
    %801 = vmatprep.subr.mxu0 0.0
    %802 = vmatpush1.msra.mxu0 %v487
    %803 = vmatprep.subr.mxu0 0.0
    %804 = vmatpush1.msra.mxu0 %v488
    %805 = vmatprep.subr.mxu0 0.0
    %806 = vmatpush1.msra.mxu0 %v489
    %807 = vmatprep.subr.mxu0 0.0
    %808 = vmatpush1.msra.mxu0 %v490
    %809 = vmatprep.subr.mxu0 0.0
    %810 = vmatpush1.msra.mxu0 %v491
    %811 = vmatprep.subr.mxu0 0.0
    %812 = vmatpush1.msra.mxu0 %v492
    %813 = vmatprep.subr.mxu0 0.0
    %814 = vmatpush1.msra.mxu0 %v493
    %815 = vmatprep.subr.mxu0 0.0
    %816 = vmatpush1.msra.mxu0 0.0
    %817 = vmatprep.subr.mxu0 0.0
    %818 = vmatpush1.msra.mxu0 0.0
    %819 = vmatprep.subr.mxu0 0.0
    %820 = vmatpush1.msra.mxu0 0.0
    %821 = vmatprep.subr.mxu0 0.0
    %822 = vmatpush1.msra.mxu0 0.0
    %823 = vmatprep.subr.mxu0 0.0
    %824 = vmatpush1.msra.mxu0 0.0
    %825 = vmatprep.subr.mxu0 0.0
    %826 = vmatpush1.msra.mxu0 0.0
    %827 = vmatprep.subr.mxu0 0.0
    %828 = vmatpush1.msra.mxu0 0.0
    %829 = vmatprep.subr.mxu0 0.0
    %830 = vmatpush1.msra.mxu0 0.0
    %831 = vmatprep.subr.mxu0 0.0
    %832 = vmatpush1.msra.mxu0 0.0
    %833 = vmatprep.subr.mxu0 0.0
    %834 = vmatpush1.msra.mxu0 0.0
    %835 = vmatprep.subr.mxu0 0.0
    %836 = vmatpush1.msra.mxu0 0.0
    %837 = vmatprep.subr.mxu0 0.0
    %838 = vmatpush1.msra.mxu0 0.0
    %839 = vmatprep.subr.mxu0 0.0
    %840 = vmatpush1.msra.mxu0 0.0
    %841 = vmatprep.subr.mxu0 0.0
    %842 = vmatpush1.msra.mxu0 0.0
    %843 = vmatprep.subr.mxu0 0.0
    %844 = vmatpush1.msra.mxu0 0.0
    %845 = vmatprep.subr.mxu0 0.0
    %846 = vmatpush1.msra.mxu0 0.0
    %847 = vmatprep.mubr.f32.mxu0 0.0
    %848 = vmatmul.mubr.f32.gmra.mrb[0].mxu0 %v782
    %v849 = vpop.f32.mrb[0].mxu0
    %v850 = vadd.f32 0.0, %v849
    %v851 = vpop.f32.mrb[0].mxu0
    %852 = vdwg.mxu0
    %v853 = vadd.f32 %v465, %v850
    %v854 = vtanh.pop %v853
    %855 = vmatprep.subr.mxu0 0.0
    %856 = vmatpush1.msra.mxu0 %v478
    %857 = vmatprep.subr.mxu0 0.0
    %858 = vmatpush1.msra.mxu0 %v479
    %859 = vmatprep.subr.mxu0 0.0
    %860 = vmatpush1.msra.mxu0 %v480
    %861 = vmatprep.subr.mxu0 0.0
    %862 = vmatpush1.msra.mxu0 %v481
    %863 = vmatprep.subr.mxu0 0.0
    %864 = vmatpush1.msra.mxu0 %v482
    %865 = vmatprep.subr.mxu0 0.0
    %866 = vmatpush1.msra.mxu0 %v483
    %867 = vmatprep.subr.mxu0 0.0
    %868 = vmatpush1.msra.mxu0 %v484
    %869 = vmatprep.subr.mxu0 0.0
    %870 = vmatpush1.msra.mxu0 %v485
    %871 = vmatprep.subr.mxu0 0.0
    %872 = vmatpush1.msra.mxu0 %v486
    %873 = vmatprep.subr.mxu0 0.0
    %874 = vmatpush1.msra.mxu0 %v487
    %875 = vmatprep.subr.mxu0 0.0
    %876 = vmatpush1.msra.mxu0 %v488
    %877 = vmatprep.subr.mxu0 0.0
    %878 = vmatpush1.msra.mxu0 %v489
    %879 = vmatprep.subr.mxu0 0.0
    %880 = vmatpush1.msra.mxu0 %v490
    %881 = vmatprep.subr.mxu0 0.0
    %882 = vmatpush1.msra.mxu0 %v491
    %883 = vmatprep.subr.mxu0 0.0
    %884 = vmatpush1.msra.mxu0 %v492
    %885 = vmatprep.subr.mxu0 0.0
    %886 = vmatpush1.msra.mxu0 %v493
    %887 = vmatprep.subr.mxu0 0.0
    %888 = vmatpush1.msra.mxu0 0.0
    %889 = vmatprep.subr.mxu0 0.0
    %890 = vmatpush1.msra.mxu0 0.0
    %891 = vmatprep.subr.mxu0 0.0
    %892 = vmatpush1.msra.mxu0 0.0
    %893 = vmatprep.subr.mxu0 0.0
    %894 = vmatpush1.msra.mxu0 0.0
    %895 = vmatprep.subr.mxu0 0.0
    %896 = vmatpush1.msra.mxu0 0.0
    %897 = vmatprep.subr.mxu0 0.0
    %898 = vmatpush1.msra.mxu0 0.0
    %899 = vmatprep.subr.mxu0 0.0
    %900 = vmatpush1.msra.mxu0 0.0
    %901 = vmatprep.subr.mxu0 0.0
    %902 = vmatpush1.msra.mxu0 0.0
    %903 = vmatprep.subr.mxu0 0.0
    %904 = vmatpush1.msra.mxu0 0.0
    %905 = vmatprep.subr.mxu0 0.0
    %906 = vmatpush1.msra.mxu0 0.0
    %907 = vmatprep.subr.mxu0 0.0
    %908 = vmatpush1.msra.mxu0 0.0
    %909 = vmatprep.subr.mxu0 0.0
    %910 = vmatpush1.msra.mxu0 0.0
    %911 = vmatprep.subr.mxu0 0.0
    %912 = vmatpush1.msra.mxu0 0.0
    %913 = vmatprep.subr.mxu0 0.0
    %914 = vmatpush1.msra.mxu0 0.0
    %915 = vmatprep.subr.mxu0 0.0
    %916 = vmatpush1.msra.mxu0 0.0
    %917 = vmatprep.subr.mxu0 0.0
    %918 = vmatpush1.msra.mxu0 0.0
    %919 = vmatprep.mubr.f32.mxu0 0.0
    %920 = vmatmul.mubr.f32.gmra.mrb[0].mxu0 %v854
    %v921 = vpop.f32.mrb[0].mxu0
    %v922 = vadd.f32 0.0, %v921
    %v923 = vpop.f32.mrb[0].mxu0
    %924 = vdwg.mxu0
    %v925 = vadd.f32 %v470, %v922
    %v926 = vtanh.pop %v925
    %927 = vmatprep.subr.mxu0 0.0
    %928 = vmatpush1.msra.mxu0 %v478
    %929 = vmatprep.subr.mxu0 0.0
    %930 = vmatpush1.msra.mxu0 %v479
    %931 = vmatprep.subr.mxu0 0.0
    %932 = vmatpush1.msra.mxu0 %v480
    %933 = vmatprep.subr.mxu0 0.0
    %934 = vmatpush1.msra.mxu0 %v481
    %935 = vmatprep.subr.mxu0 0.0
    %936 = vmatpush1.msra.mxu0 %v482
    %937 = vmatprep.subr.mxu0 0.0
    %938 = vmatpush1.msra.mxu0 %v483
    %939 = vmatprep.subr.mxu0 0.0
    %940 = vmatpush1.msra.mxu0 %v484
    %941 = vmatprep.subr.mxu0 0.0
    %942 = vmatpush1.msra.mxu0 %v485
    %943 = vmatprep.subr.mxu0 0.0
    %944 = vmatpush1.msra.mxu0 %v486
    %945 = vmatprep.subr.mxu0 0.0
    %946 = vmatpush1.msra.mxu0 %v487
    %947 = vmatprep.subr.mxu0 0.0
    %948 = vmatpush1.msra.mxu0 %v488
    %949 = vmatprep.subr.mxu0 0.0
    %950 = vmatpush1.msra.mxu0 %v489
    %951 = vmatprep.subr.mxu0 0.0
    %952 = vmatpush1.msra.mxu0 %v490
    %953 = vmatprep.subr.mxu0 0.0
    %954 = vmatpush1.msra.mxu0 %v491
    %955 = vmatprep.subr.mxu0 0.0
    %956 = vmatpush1.msra.mxu0 %v492
    %957 = vmatprep.subr.mxu0 0.0
    %958 = vmatpush1.msra.mxu0 %v493
    %959 = vmatprep.subr.mxu0 0.0
    %960 = vmatpush1.msra.mxu0 0.0
    %961 = vmatprep.subr.mxu0 0.0
    %962 = vmatpush1.msra.mxu0 0.0
    %963 = vmatprep.subr.mxu0 0.0
    %964 = vmatpush1.msra.mxu0 0.0
    %965 = vmatprep.subr.mxu0 0.0
    %966 = vmatpush1.msra.mxu0 0.0
    %967 = vmatprep.subr.mxu0 0.0
    %968 = vmatpush1.msra.mxu0 0.0
    %969 = vmatprep.subr.mxu0 0.0
    %970 = vmatpush1.msra.mxu0 0.0
    %971 = vmatprep.subr.mxu0 0.0
    %972 = vmatpush1.msra.mxu0 0.0
    %973 = vmatprep.subr.mxu0 0.0
    %974 = vmatpush1.msra.mxu0 0.0
    %975 = vmatprep.subr.mxu0 0.0
    %976 = vmatpush1.msra.mxu0 0.0
    %977 = vmatprep.subr.mxu0 0.0
    %978 = vmatpush1.msra.mxu0 0.0
    %979 = vmatprep.subr.mxu0 0.0
    %980 = vmatpush1.msra.mxu0 0.0
    %981 = vmatprep.subr.mxu0 0.0
    %982 = vmatpush1.msra.mxu0 0.0
    %983 = vmatprep.subr.mxu0 0.0
    %984 = vmatpush1.msra.mxu0 0.0
    %985 = vmatprep.subr.mxu0 0.0
    %986 = vmatpush1.msra.mxu0 0.0
    %987 = vmatprep.subr.mxu0 0.0
    %988 = vmatpush1.msra.mxu0 0.0
    %989 = vmatprep.subr.mxu0 0.0
    %990 = vmatpush1.msra.mxu0 0.0
    %991 = vmatprep.mubr.f32.mxu0 0.0
    %992 = vmatmul.mubr.f32.gmra.mrb[0].mxu0 %v926
    %v993 = vpop.f32.mrb[0].mxu0
    %v994 = vadd.f32 0.0, %v993
    %v995 = vpop.f32.mrb[0].mxu0
    %996 = vdwg.mxu0
    %v997 = vadd.f32 %v475, %v994
    %v998 = vtanh.pop %v997
    %v999 = vld [vmem:[#allocation11] sm:$0xff]
    %v1000 = vld [vmem:[#allocation11 + $0x8] sm:$0xff]
    %v1001 = vld [vmem:[#allocation11 + $0x10] sm:$0xff]
    %v1002 = vld [vmem:[#allocation11 + $0x18] sm:$0xff]
    %v1003 = vld [vmem:[#allocation11 + $0x20] sm:$0xff]
    %v1004 = vld [vmem:[#allocation11 + $0x28] sm:$0xff]
    %v1005 = vld [vmem:[#allocation11 + $0x30] sm:$0xff]
    %v1006 = vld [vmem:[#allocation11 + $0x38] sm:$0xff]
    %v1007 = vld [vmem:[#allocation11 + $0x40] sm:$0xff]
    %v1008 = vld [vmem:[#allocation11 + $0x48] sm:$0xff]
    %v1009 = vld [vmem:[#allocation11 + $0x50] sm:$0xff]
    %v1010 = vld [vmem:[#allocation11 + $0x58] sm:$0xff]
    %v1011 = vld [vmem:[#allocation11 + $0x60] sm:$0xff]
    %v1012 = vld [vmem:[#allocation11 + $0x68] sm:$0xff]
    %v1013 = vld [vmem:[#allocation11 + $0x70] sm:$0xff]
    %v1014 = vld [vmem:[#allocation11 + $0x78] sm:$0xff]
    %v1015 = vld [vmem:[%s6] sm:$0x1]
    %v1017 = vlaneseq
    %v1018 = vshrl.u32 %v1017, 7
    %v1019 = vsub.s32 0, %v1018
    %v1020 = vrot.slane %v1015, %v1019
    %1022 = vmatprep.subr.mxu0 0.0
    %1023 = vmatpush1.msra.mxu0 %v999
    %1024 = vmatprep.subr.mxu0 0.0
    %1025 = vmatpush1.msra.mxu0 %v1000
    %1026 = vmatprep.subr.mxu0 0.0
    %1027 = vmatpush1.msra.mxu0 %v1001
    %1028 = vmatprep.subr.mxu0 0.0
    %1029 = vmatpush1.msra.mxu0 %v1002
    %1030 = vmatprep.subr.mxu0 0.0
    %1031 = vmatpush1.msra.mxu0 %v1003
    %1032 = vmatprep.subr.mxu0 0.0
    %1033 = vmatpush1.msra.mxu0 %v1004
    %1034 = vmatprep.subr.mxu0 0.0
    %1035 = vmatpush1.msra.mxu0 %v1005
    %1036 = vmatprep.subr.mxu0 0.0
    %1037 = vmatpush1.msra.mxu0 %v1006
    %1038 = vmatprep.subr.mxu0 0.0
    %1039 = vmatpush1.msra.mxu0 %v1007
    %1040 = vmatprep.subr.mxu0 0.0
    %1041 = vmatpush1.msra.mxu0 %v1008
    %1042 = vmatprep.subr.mxu0 0.0
    %1043 = vmatpush1.msra.mxu0 %v1009
    %1044 = vmatprep.subr.mxu0 0.0
    %1045 = vmatpush1.msra.mxu0 %v1010
    %1046 = vmatprep.subr.mxu0 0.0
    %1047 = vmatpush1.msra.mxu0 %v1011
    %1048 = vmatprep.subr.mxu0 0.0
    %1049 = vmatpush1.msra.mxu0 %v1012
    %1050 = vmatprep.subr.mxu0 0.0
    %1051 = vmatpush1.msra.mxu0 %v1013
    %1052 = vmatprep.subr.mxu0 0.0
    %1053 = vmatpush1.msra.mxu0 %v1014
    %1054 = vmatprep.subr.mxu0 0.0
    %1055 = vmatpush1.msra.mxu0 0.0
    %1056 = vmatprep.subr.mxu0 0.0
    %1057 = vmatpush1.msra.mxu0 0.0
    %1058 = vmatprep.subr.mxu0 0.0
    %1059 = vmatpush1.msra.mxu0 0.0
    %1060 = vmatprep.subr.mxu0 0.0
    %1061 = vmatpush1.msra.mxu0 0.0
    %1062 = vmatprep.subr.mxu0 0.0
    %1063 = vmatpush1.msra.mxu0 0.0
    %1064 = vmatprep.subr.mxu0 0.0
    %1065 = vmatpush1.msra.mxu0 0.0
    %1066 = vmatprep.subr.mxu0 0.0
    %1067 = vmatpush1.msra.mxu0 0.0
    %1068 = vmatprep.subr.mxu0 0.0
    %1069 = vmatpush1.msra.mxu0 0.0
    %1070 = vmatprep.subr.mxu0 0.0
    %1071 = vmatpush1.msra.mxu0 0.0
    %1072 = vmatprep.subr.mxu0 0.0
    %1073 = vmatpush1.msra.mxu0 0.0
    %1074 = vmatprep.subr.mxu0 0.0
    %1075 = vmatpush1.msra.mxu0 0.0
    %1076 = vmatprep.subr.mxu0 0.0
    %1077 = vmatpush1.msra.mxu0 0.0
    %1078 = vmatprep.subr.mxu0 0.0
    %1079 = vmatpush1.msra.mxu0 0.0
    %1080 = vmatprep.subr.mxu0 0.0
    %1081 = vmatpush1.msra.mxu0 0.0
    %1082 = vmatprep.subr.mxu0 0.0
    %1083 = vmatpush1.msra.mxu0 0.0
    %1084 = vmatprep.subr.mxu0 0.0
    %1085 = vmatpush1.msra.mxu0 0.0
    %1086 = vmatprep.mubr.f32.mxu0 0.0
    %1087 = vmatmul.mubr.f32.gmra.mrb[0].mxu0 %v998
    %v1088 = vpop.f32.mrb[0].mxu0
    %v1089 = vadd.f32 %v1020, %v1088
    %v1090 = vpop.f32.mrb[0].mxu0
    %1091 = vdwg.mxu0
    %v1092 = vmax.f32 %v1089, 0.0
    %1093 = vst [vmem:[#allocation13] sm:$0xff] %v1092
    // Predicated region
    $region42: #{rnn_forward.1} parent=1 // pred_check
      _
    $region43: #{rnn_forward.1} parent=1 // pred_check_branch
      %1095 = sbr.rel (0) target = $region45
    $region44: #{rnn_forward.1} parent=1 // pred_region
      %s1097 = ssub.s32 128, 128
      %1098 = vsyncadd [#allocation7], %s1097
      %s1100 = sshll.u32 [#allocation13], 4
      %s1101 = int_to_ptr.vmem [resolvable:$true] %s1100
      %1103 = dma.vmem_to_hbm [thread:$0]  %s1101, 128, %s7, [#allocation7]
    $region45: #{rnn_forward.1} parent=1 // pred_fallthru
      _
    // Predicated region
    $region46: #{rnn_forward.1} parent=1 // pred_check
      _
    $region47: #{rnn_forward.1} parent=1 // pred_check_branch
      %1105 = sbr.rel (0) target = $region49
    $region48: #{rnn_forward.1} parent=1 // pred_region
      %1106 = dma.done [#allocation7], 128
    $region49: #{rnn_forward.1} parent=1 // pred_fallthru
      _
    %1107 = vsyncpa [#allocation6], 1
    %1108 = vsyncpa [#allocation9], 1
    %1109 = vsyncpa [#allocation12], 1
    %1110 = vsyncpa [#allocation7], 1

</llo_original>
